<compile_context>
chip_gen: v7x
topology: tpu7x:2x2x1
jax: 0.10.0
libtpu: 0.0.40
codegen_flags: <defaults>
</compile_context>

<pallas_src>
import jax
import jax.numpy as jnp
from jax.experimental import pallas as pl
from jax.experimental.pallas import tpu as pltpu


def bn_add_conv_kernel(x_ref, r_ref, gamma_ref, beta_ref, w_ref, o_ref):
    # x_ref, r_ref: [C, M]   gamma/beta: [C, 1]   w_ref: [Cout, C]   o_ref: [Cout, M]
    x = x_ref[...]
    r = r_ref[...]
    gamma = gamma_ref[...]
    beta = beta_ref[...]

    m = jnp.float32(x.shape[1])
    # Single-pass batch statistics: E[x], E[x^2]  ->  var = E[x^2] - E[x]^2
    # (one reduction pass instead of mean + a second centered pass).
    s1 = jnp.sum(x, axis=1, keepdims=True)
    s2 = jnp.sum(x * x, axis=1, keepdims=True)
    mean = s1 / m
    var = s2 / m - mean * mean                      # biased variance (normalization)
    inv = jax.lax.rsqrt(var + jnp.float32(1e-5))

    scale = gamma * inv                             # [C, 1]
    shift = beta - mean * scale                     # [C, 1]
    z = x * scale + shift + r                       # batchnorm + residual add (f32)

    # bf16 MXU operands with f32 accumulation: native MXU dtype on v6e/v7x
    # (~3x faster than emulated f32 matmul); elementwise math above stays f32
    # (v5e VPU/EUP have no bf16 anyway).
    o_ref[...] = jnp.dot(
        w_ref[...].astype(jnp.bfloat16), z.astype(jnp.bfloat16),
        preferred_element_type=jnp.float32).astype(o_ref.dtype)


def model_forward(x291, x278, gamma, beta, conv_w):
    """x291, x278: [N, C, H, W];  conv_w: [Cout, C, 1, 1] (PyTorch layout)."""
    N, C, H, W = x291.shape
    Cout = conv_w.shape[0]
    assert N == 1, "channels-major [C, M] fast path assumes N == 1"
    M = N * H * W

    # Free reshapes (no transposes): NCHW with N=1 -> [C, M]
    x = x291.reshape(C, M)
    r = x278.reshape(C, M)
    w = conv_w.reshape(Cout, C)                     # used as-is, no .T
    g = gamma.reshape(C, 1)
    b = beta.reshape(C, 1)

    cost = pl.CostEstimate(
        flops=2 * M * C * Cout + 8 * M * C,
        transcendentals=C,
        bytes_accessed=(2 * M * C + C * Cout + M * Cout + 2 * C) * 4,
    )

    # Single block: total footprint is ~1.2 MB, far under every chip's VMEM,
    # and full-batch statistics require one block covering all of M.
    # TODO(synk): if M ever grows large, restructure into a stats pass + an
    # M-tiled normalize/matmul pass ("parallel" on M, sized to v7x's 64 MiB
    # VMEM) — naive tiling here would silently turn BN into per-tile stats.
    out_cm = pl.pallas_call(
        bn_add_conv_kernel,
        out_shape=jax.ShapeDtypeStruct((Cout, M), jnp.float32),
        grid=(1,),
        in_specs=[
            pl.BlockSpec((C, M), lambda i: (0, 0)),
            pl.BlockSpec((C, M), lambda i: (0, 0)),
            pl.BlockSpec((C, 1), lambda i: (0, 0)),
            pl.BlockSpec((C, 1), lambda i: (0, 0)),
            pl.BlockSpec((Cout, C), lambda i: (0, 0)),
        ],
        out_specs=pl.BlockSpec((Cout, M), lambda i: (0, 0)),
        compiler_params=pltpu.CompilerParams(
            dimension_semantics=("arbitrary",)),
        cost_estimate=cost,
    )(x, r, g, b, w)

    # [Cout, M] -> [N, Cout, H, W] is again a free reshape for N=1.
    return out_cm.reshape(N, Cout, H, W)


def reference_forward(x291, x278, gamma, beta, conv_w):
    """Pure-JAX reference for a sanity check."""
    eps = 1e-5
    mean = jnp.mean(x291, axis=(0, 2, 3), keepdims=True)
    var = jnp.var(x291, axis=(0, 2, 3), keepdims=True)
    y = (x291 - mean) / jnp.sqrt(var + eps)
    y = y * gamma.reshape(1, -1, 1, 1) + beta.reshape(1, -1, 1, 1)
    z = y + x278
    return jax.lax.conv_general_dilated(
        z, conv_w, window_strides=(1, 1), padding="VALID",
        dimension_numbers=("NCHW", "OIHW", "NCHW"))


if __name__ == "__main__":
    key = jax.random.PRNGKey(0)
    k1, k2, k3, k4, k5 = jax.random.split(key, 5)

    N, C, H, W, Cout = 1, 128, 14, 14, 768
    x291 = jax.random.normal(k1, (N, C, H, W), dtype=jnp.float32)
    x278 = jax.random.normal(k2, (N, C, H, W), dtype=jnp.float32)

    # Deterministic parameter init (synthetic; shapes from module __init__)
    gamma = 1.0 + 0.1 * jax.random.normal(k3, (C,), dtype=jnp.float32)
    beta = 0.1 * jax.random.normal(k4, (C,), dtype=jnp.float32)
    conv_w = 0.05 * jax.random.normal(k5, (Cout, C, 1, 1), dtype=jnp.float32)

    out = model_forward(x291, x278, gamma, beta, conv_w)
    jax.block_until_ready(out)

    ref = reference_forward(x291, x278, gamma, beta, conv_w)
    assert out.shape == (N, Cout, H, W), out.shape
    # Tolerance loosened vs the pure-f32 version to cover bf16 quantization of
    # the MXU operands (K=128 contraction): observed error is a few 1e-3.
    assert jnp.allclose(out, ref, atol=1e-2, rtol=1e-2), float(
        jnp.max(jnp.abs(out - ref)))

    print("KERNEL_OK")
</pallas_src>

<mosaic_0001>
module attributes {stable_mosaic.version = 11 : i64} {
  func.func @bn_add_conv_kernel(%arg0: i32, %arg1: memref<128x196xf32, #tpu.memory_space<vmem>>, %arg2: memref<128x196xf32, #tpu.memory_space<vmem>>, %arg3: memref<128x1xf32, #tpu.memory_space<vmem>>, %arg4: memref<128x1xf32, #tpu.memory_space<vmem>>, %arg5: memref<768x128xf32, #tpu.memory_space<vmem>>, %arg6: memref<768x196xf32, #tpu.memory_space<vmem>>) attributes {dimension_semantics = [#tpu.dimension_semantics<arbitrary>], iteration_bounds = array<i64: 1>, scalar_prefetch = 0 : i64, scratch_operands = 0 : i64, tpu.core_type = #tpu.core_type<tc>, window_params = [{pipeline_mode = #tpu.pipeline_mode<synchronous>, transform_indices = @transform_0, window_bounds = array<i64: 128, 196>}, {pipeline_mode = #tpu.pipeline_mode<synchronous>, transform_indices = @transform_1, window_bounds = array<i64: 128, 196>}, {pipeline_mode = #tpu.pipeline_mode<synchronous>, transform_indices = @transform_2, window_bounds = array<i64: 128, 1>}, {pipeline_mode = #tpu.pipeline_mode<synchronous>, transform_indices = @transform_3, window_bounds = array<i64: 128, 1>}, {pipeline_mode = #tpu.pipeline_mode<synchronous>, transform_indices = @transform_4, window_bounds = array<i64: 768, 128>}, {pipeline_mode = #tpu.pipeline_mode<synchronous>, transform_indices = @transform_5, window_bounds = array<i64: 768, 196>}]} {
    %c0 = arith.constant 0 : index
    %c0_0 = arith.constant 0 : index
    %0 = vector.load %arg1[%c0, %c0_0] : memref<128x196xf32, #tpu.memory_space<vmem>>, vector<128x196xf32>
    %c0_1 = arith.constant 0 : index
    %c0_2 = arith.constant 0 : index
    %1 = vector.load %arg2[%c0_1, %c0_2] : memref<128x196xf32, #tpu.memory_space<vmem>>, vector<128x196xf32>
    %c0_3 = arith.constant 0 : index
    %c0_4 = arith.constant 0 : index
    %2 = vector.load %arg3[%c0_3, %c0_4] : memref<128x1xf32, #tpu.memory_space<vmem>>, vector<128x1xf32>
    %c0_5 = arith.constant 0 : index
    %c0_6 = arith.constant 0 : index
    %3 = vector.load %arg4[%c0_5, %c0_6] : memref<128x1xf32, #tpu.memory_space<vmem>>, vector<128x1xf32>
    %cst = arith.constant dense<0.000000e+00> : vector<128xf32>
    %4 = vector.multi_reduction <add>, %0, %cst [1] : vector<128x196xf32> to vector<128xf32>
    %5 = vector.shape_cast %4 : vector<128xf32> to vector<128x1xf32>
    %6 = arith.mulf %0, %0 : vector<128x196xf32>
    %cst_7 = arith.constant dense<0.000000e+00> : vector<128xf32>
    %7 = vector.multi_reduction <add>, %6, %cst_7 [1] : vector<128x196xf32> to vector<128xf32>
    %8 = vector.shape_cast %7 : vector<128xf32> to vector<128x1xf32>
    %cst_8 = arith.constant 1.960000e+02 : f32
    %9 = vector.broadcast %cst_8 : f32 to vector<128x1xf32>
    %10 = arith.divf %5, %9 : vector<128x1xf32>
    %cst_9 = arith.constant 1.960000e+02 : f32
    %11 = vector.broadcast %cst_9 : f32 to vector<128x1xf32>
    %12 = arith.divf %8, %11 : vector<128x1xf32>
    %13 = arith.mulf %10, %10 : vector<128x1xf32>
    %14 = arith.subf %12, %13 : vector<128x1xf32>
    %cst_10 = arith.constant 9.99999974E-6 : f32
    %15 = vector.broadcast %cst_10 : f32 to vector<128x1xf32>
    %16 = arith.addf %14, %15 : vector<128x1xf32>
    %17 = math.rsqrt %16 : vector<128x1xf32>
    %18 = arith.mulf %2, %17 : vector<128x1xf32>
    %19 = arith.mulf %10, %18 : vector<128x1xf32>
    %20 = arith.subf %3, %19 : vector<128x1xf32>
    %21 = vector.broadcast %18 : vector<128x1xf32> to vector<128x196xf32>
    %22 = arith.mulf %0, %21 : vector<128x196xf32>
    %23 = vector.broadcast %20 : vector<128x1xf32> to vector<128x196xf32>
    %24 = arith.addf %22, %23 : vector<128x196xf32>
    %25 = arith.addf %24, %1 : vector<128x196xf32>
    %c0_11 = arith.constant 0 : index
    %c0_12 = arith.constant 0 : index
    %26 = vector.load %arg5[%c0_11, %c0_12] : memref<768x128xf32, #tpu.memory_space<vmem>>, vector<768x128xf32>
    %27 = arith.truncf %26 : vector<768x128xf32> to vector<768x128xbf16>
    %28 = arith.truncf %25 : vector<128x196xf32> to vector<128x196xbf16>
    %cst_13 = arith.constant dense<0.000000e+00> : vector<768x196xf32>
    %29 = tpu.matmul %27, %28, %cst_13 {dimension_numbers = #tpu.dot_dimension_numbers<[1], [0], [0], [1], [0, 0, 1, 1], [], []>} : vector<768x128xbf16>, vector<128x196xbf16>, vector<768x196xf32> -> vector<768x196xf32>
    %c0_14 = arith.constant 0 : index
    %c0_15 = arith.constant 0 : index
    %30 = vector.load %arg6[%c0_14, %c0_15] : memref<768x196xf32, #tpu.memory_space<vmem>>, vector<768x196xf32>
    tpu.vector_store %arg6[%c0_14, %c0_15], %29 {strides = array<i32>} : memref<768x196xf32, #tpu.memory_space<vmem>>, vector<768x196xf32>,
    return
  }
  func.func @transform_0(%arg0: i32) -> (i32, i32) {
    %c0_i32 = arith.constant 0 : i32
    %c0_i32_0 = arith.constant 0 : i32
    %c0_i32_1 = arith.constant 0 : i32
    return %c0_i32, %c0_i32_0 : i32, i32
  }
  func.func @transform_1(%arg0: i32) -> (i32, i32) {
    %c0_i32 = arith.constant 0 : i32
    %c0_i32_0 = arith.constant 0 : i32
    %c0_i32_1 = arith.constant 0 : i32
    return %c0_i32, %c0_i32_0 : i32, i32
  }
  func.func @transform_2(%arg0: i32) -> (i32, i32) {
    %c0_i32 = arith.constant 0 : i32
    %c0_i32_0 = arith.constant 0 : i32
    %c0_i32_1 = arith.constant 0 : i32
    return %c0_i32, %c0_i32_0 : i32, i32
  }
  func.func @transform_3(%arg0: i32) -> (i32, i32) {
    %c0_i32 = arith.constant 0 : i32
    %c0_i32_0 = arith.constant 0 : i32
    %c0_i32_1 = arith.constant 0 : i32
    return %c0_i32, %c0_i32_0 : i32, i32
  }
  func.func @transform_4(%arg0: i32) -> (i32, i32) {
    %c0_i32 = arith.constant 0 : i32
    %c0_i32_0 = arith.constant 0 : i32
    %c0_i32_1 = arith.constant 0 : i32
    return %c0_i32, %c0_i32_0 : i32, i32
  }
  func.func @transform_5(%arg0: i32) -> (i32, i32) {
    %c0_i32 = arith.constant 0 : i32
    %c0_i32_0 = arith.constant 0 : i32
    %c0_i32_1 = arith.constant 0 : i32
    return %c0_i32, %c0_i32_0 : i32, i32
  }
}

</mosaic_0001>

<llo_original>
// kernel: tpu_custom_call.1
$region0: #{tpu_custom_call.1}
  #allocation0 [shape = 'u32[]', space=smem, size = 0x4, offset = 0x4, fixed_abs, tag = 'smem constant byte address 0x4 - core index']
  #allocation1 [shape = 'u32[144,128]{1,0:T(1,128)}', space=vmem, size = 0x12000, scoped, tag = 'internal scratch']
  %s0 = inlined_call_operand.vmem [shape: f32[128,196], index: 0, kind: input, shape index: {}]
  %s1 = inlined_call_operand.vmem [shape: f32[128,196], index: 1, kind: input, shape index: {}]
  %s2 = inlined_call_operand.vmem [shape: f32[128,1], index: 2, kind: input, shape index: {}]
  %s3 = inlined_call_operand.vmem [shape: f32[128,1], index: 3, kind: input, shape index: {}]
  %s4 = inlined_call_operand.vmem [shape: f32[768,128], index: 4, kind: input, shape index: {}]
  %s5 = inlined_call_operand.vmem [shape: f32[768,196], index: 5, kind: output, shape index: {}]
  %s6 = sld [smem:[#allocation0]]
  $region30: #{tpu_custom_call.1} parent=0
    _
  %s8 = ssub.s32 1, %s6
  %s9 = scalar_select 0, %s8, %s6
  // Predicated region
  $region2: #{tpu_custom_call.1} parent=0 // pred_check
    _
  $region3: #{tpu_custom_call.1} parent=0 // pred_check_branch
    %11 = sbr.rel (0) target = $region5
  $region4: #{tpu_custom_call.1} parent=0 // pred_region
    _
  $region5: #{tpu_custom_call.1} parent=0 // pred_fallthru
    _
  // Predicated region
  $region6: #{tpu_custom_call.1} parent=0 // pred_check
    _
  $region7: #{tpu_custom_call.1} parent=0 // pred_check_branch
    %13 = sbr.rel (0) target = $region9
  $region8: #{tpu_custom_call.1} parent=0 // pred_region
    _
  $region9: #{tpu_custom_call.1} parent=0 // pred_fallthru
    _
  // Predicated region
  $region10: #{tpu_custom_call.1} parent=0 // pred_check
    _
  $region11: #{tpu_custom_call.1} parent=0 // pred_check_branch
    %15 = sbr.rel (0) target = $region13
  $region12: #{tpu_custom_call.1} parent=0 // pred_region
    _
  $region13: #{tpu_custom_call.1} parent=0 // pred_fallthru
    _
  // Predicated region
  $region14: #{tpu_custom_call.1} parent=0 // pred_check
    _
  $region15: #{tpu_custom_call.1} parent=0 // pred_check_branch
    %17 = sbr.rel (0) target = $region17
  $region16: #{tpu_custom_call.1} parent=0 // pred_region
    _
  $region17: #{tpu_custom_call.1} parent=0 // pred_fallthru
    _
  // Predicated region
  $region18: #{tpu_custom_call.1} parent=0 // pred_check
    _
  $region19: #{tpu_custom_call.1} parent=0 // pred_check_branch
    %19 = sbr.rel (0) target = $region21
  $region20: #{tpu_custom_call.1} parent=0 // pred_region
    _
  $region21: #{tpu_custom_call.1} parent=0 // pred_fallthru
    _
  %v21 = vld [vmem:[%s0] sm:$0xff]
  %v22 = vld [vmem:[%s0 + $0x8] sm:$0xff]
  %v23 = vld [vmem:[%s0 + $0x10] sm:$0xff]
  %v24 = vld [vmem:[%s0 + $0x18] sm:$0xff]
  %v25 = vld [vmem:[%s0 + $0x20] sm:$0xff]
  %v26 = vld [vmem:[%s0 + $0x28] sm:$0xff]
  %v27 = vld [vmem:[%s0 + $0x30] sm:$0xff]
  %v28 = vld [vmem:[%s0 + $0x38] sm:$0xff]
  %v29 = vld [vmem:[%s0 + $0x40] sm:$0xff]
  %v30 = vld [vmem:[%s0 + $0x48] sm:$0xff]
  %v31 = vld [vmem:[%s0 + $0x50] sm:$0xff]
  %v32 = vld [vmem:[%s0 + $0x58] sm:$0xff]
  %v33 = vld [vmem:[%s0 + $0x60] sm:$0xff]
  %v34 = vld [vmem:[%s0 + $0x68] sm:$0xff]
  %v35 = vld [vmem:[%s0 + $0x70] sm:$0xff]
  %v36 = vld [vmem:[%s0 + $0x78] sm:$0xff]
  %v37 = vld [vmem:[%s0 + $0x80] sm:$0xff]
  %v38 = vld [vmem:[%s0 + $0x88] sm:$0xff]
  %v39 = vld [vmem:[%s0 + $0x90] sm:$0xff]
  %v40 = vld [vmem:[%s0 + $0x98] sm:$0xff]
  %v41 = vld [vmem:[%s0 + $0xa0] sm:$0xff]
  %v42 = vld [vmem:[%s0 + $0xa8] sm:$0xff]
  %v43 = vld [vmem:[%s0 + $0xb0] sm:$0xff]
  %v44 = vld [vmem:[%s0 + $0xb8] sm:$0xff]
  %v45 = vld [vmem:[%s0 + $0xc0] sm:$0xff]
  %v46 = vld [vmem:[%s0 + $0xc8] sm:$0xff]
  %v47 = vld [vmem:[%s0 + $0xd0] sm:$0xff]
  %v48 = vld [vmem:[%s0 + $0xd8] sm:$0xff]
  %v49 = vld [vmem:[%s0 + $0xe0] sm:$0xff]
  %v50 = vld [vmem:[%s0 + $0xe8] sm:$0xff]
  %v51 = vld [vmem:[%s0 + $0xf0] sm:$0xff]
  %v52 = vld [vmem:[%s0 + $0xf8] sm:$0xff]
  %v53 = vld [vmem:[%s1] sm:$0xff]
  %v54 = vld [vmem:[%s1 + $0x8] sm:$0xff]
  %v55 = vld [vmem:[%s1 + $0x10] sm:$0xff]
  %v56 = vld [vmem:[%s1 + $0x18] sm:$0xff]
  %v57 = vld [vmem:[%s1 + $0x20] sm:$0xff]
  %v58 = vld [vmem:[%s1 + $0x28] sm:$0xff]
  %v59 = vld [vmem:[%s1 + $0x30] sm:$0xff]
  %v60 = vld [vmem:[%s1 + $0x38] sm:$0xff]
  %v61 = vld [vmem:[%s1 + $0x40] sm:$0xff]
  %v62 = vld [vmem:[%s1 + $0x48] sm:$0xff]
  %v63 = vld [vmem:[%s1 + $0x50] sm:$0xff]
  %v64 = vld [vmem:[%s1 + $0x58] sm:$0xff]
  %v65 = vld [vmem:[%s1 + $0x60] sm:$0xff]
  %v66 = vld [vmem:[%s1 + $0x68] sm:$0xff]
  %v67 = vld [vmem:[%s1 + $0x70] sm:$0xff]
  %v68 = vld [vmem:[%s1 + $0x78] sm:$0xff]
  %v69 = vld [vmem:[%s1 + $0x80] sm:$0xff]
  %v70 = vld [vmem:[%s1 + $0x88] sm:$0xff]
  %v71 = vld [vmem:[%s1 + $0x90] sm:$0xff]
  %v72 = vld [vmem:[%s1 + $0x98] sm:$0xff]
  %v73 = vld [vmem:[%s1 + $0xa0] sm:$0xff]
  %v74 = vld [vmem:[%s1 + $0xa8] sm:$0xff]
  %v75 = vld [vmem:[%s1 + $0xb0] sm:$0xff]
  %v76 = vld [vmem:[%s1 + $0xb8] sm:$0xff]
  %v77 = vld [vmem:[%s1 + $0xc0] sm:$0xff]
  %v78 = vld [vmem:[%s1 + $0xc8] sm:$0xff]
  %v79 = vld [vmem:[%s1 + $0xd0] sm:$0xff]
  %v80 = vld [vmem:[%s1 + $0xd8] sm:$0xff]
  %v81 = vld [vmem:[%s1 + $0xe0] sm:$0xff]
  %v82 = vld [vmem:[%s1 + $0xe8] sm:$0xff]
  %v83 = vld [vmem:[%s1 + $0xf0] sm:$0xff]
  %v84 = vld [vmem:[%s1 + $0xf8] sm:$0xff]
  %v85 = vld [vmem:[%s2] sm:$0xff]
  %v86 = vld [vmem:[%s2 + $0x8] sm:$0xff]
  %v87 = vld [vmem:[%s2 + $0x10] sm:$0xff]
  %v88 = vld [vmem:[%s2 + $0x18] sm:$0xff]
  %v89 = vld [vmem:[%s2 + $0x20] sm:$0xff]
  %v90 = vld [vmem:[%s2 + $0x28] sm:$0xff]
  %v91 = vld [vmem:[%s2 + $0x30] sm:$0xff]
  %v92 = vld [vmem:[%s2 + $0x38] sm:$0xff]
  %v93 = vld [vmem:[%s2 + $0x40] sm:$0xff]
  %v94 = vld [vmem:[%s2 + $0x48] sm:$0xff]
  %v95 = vld [vmem:[%s2 + $0x50] sm:$0xff]
  %v96 = vld [vmem:[%s2 + $0x58] sm:$0xff]
  %v97 = vld [vmem:[%s2 + $0x60] sm:$0xff]
  %v98 = vld [vmem:[%s2 + $0x68] sm:$0xff]
  %v99 = vld [vmem:[%s2 + $0x70] sm:$0xff]
  %v100 = vld [vmem:[%s2 + $0x78] sm:$0xff]
  %v101 = vld [vmem:[%s3] sm:$0xff]
  %v102 = vld [vmem:[%s3 + $0x8] sm:$0xff]
  %v103 = vld [vmem:[%s3 + $0x10] sm:$0xff]
  %v104 = vld [vmem:[%s3 + $0x18] sm:$0xff]
  %v105 = vld [vmem:[%s3 + $0x20] sm:$0xff]
  %v106 = vld [vmem:[%s3 + $0x28] sm:$0xff]
  %v107 = vld [vmem:[%s3 + $0x30] sm:$0xff]
  %v108 = vld [vmem:[%s3 + $0x38] sm:$0xff]
  %v109 = vld [vmem:[%s3 + $0x40] sm:$0xff]
  %v110 = vld [vmem:[%s3 + $0x48] sm:$0xff]
  %v111 = vld [vmem:[%s3 + $0x50] sm:$0xff]
  %v112 = vld [vmem:[%s3 + $0x58] sm:$0xff]
  %v113 = vld [vmem:[%s3 + $0x60] sm:$0xff]
  %v114 = vld [vmem:[%s3 + $0x68] sm:$0xff]
  %v115 = vld [vmem:[%s3 + $0x70] sm:$0xff]
  %v116 = vld [vmem:[%s3 + $0x78] sm:$0xff]
  %vm117 = vcmask 556032
  %v118 = vsel %vm117, %v22, 0.0
  %v119 = vadd.f32 %v21, %v118
  %120 = vadd.xlane.f32.xlu0 %v119
  %v121 = vpop.xlane.xlu0 %120
  %v122 = vsel %vm117, %v24, 0.0
  %v123 = vadd.f32 %v23, %v122
  %124 = vadd.xlane.f32.xlu0 %v123
  %v125 = vpop.xlane.xlu0 %124
  %v126 = vsel %vm117, %v26, 0.0
  %v127 = vadd.f32 %v25, %v126
  %128 = vadd.xlane.f32.xlu0 %v127
  %v129 = vpop.xlane.xlu0 %128
  %v130 = vsel %vm117, %v28, 0.0
  %v131 = vadd.f32 %v27, %v130
  %132 = vadd.xlane.f32.xlu0 %v131
  %v133 = vpop.xlane.xlu0 %132
  %v134 = vsel %vm117, %v30, 0.0
  %v135 = vadd.f32 %v29, %v134
  %136 = vadd.xlane.f32.xlu0 %v135
  %v137 = vpop.xlane.xlu0 %136
  %v138 = vsel %vm117, %v32, 0.0
  %v139 = vadd.f32 %v31, %v138
  %140 = vadd.xlane.f32.xlu0 %v139
  %v141 = vpop.xlane.xlu0 %140
  %v142 = vsel %vm117, %v34, 0.0
  %v143 = vadd.f32 %v33, %v142
  %144 = vadd.xlane.f32.xlu0 %v143
  %v145 = vpop.xlane.xlu0 %144
  %v146 = vsel %vm117, %v36, 0.0
  %v147 = vadd.f32 %v35, %v146
  %148 = vadd.xlane.f32.xlu0 %v147
  %v149 = vpop.xlane.xlu0 %148
  %v150 = vsel %vm117, %v38, 0.0
  %v151 = vadd.f32 %v37, %v150
  %152 = vadd.xlane.f32.xlu0 %v151
  %v153 = vpop.xlane.xlu0 %152
  %v154 = vsel %vm117, %v40, 0.0
  %v155 = vadd.f32 %v39, %v154
  %156 = vadd.xlane.f32.xlu0 %v155
  %v157 = vpop.xlane.xlu0 %156
  %v158 = vsel %vm117, %v42, 0.0
  %v159 = vadd.f32 %v41, %v158
  %160 = vadd.xlane.f32.xlu0 %v159
  %v161 = vpop.xlane.xlu0 %160
  %v162 = vsel %vm117, %v44, 0.0
  %v163 = vadd.f32 %v43, %v162
  %164 = vadd.xlane.f32.xlu0 %v163
  %v165 = vpop.xlane.xlu0 %164
  %v166 = vsel %vm117, %v46, 0.0
  %v167 = vadd.f32 %v45, %v166
  %168 = vadd.xlane.f32.xlu0 %v167
  %v169 = vpop.xlane.xlu0 %168
  %v170 = vsel %vm117, %v48, 0.0
  %v171 = vadd.f32 %v47, %v170
  %172 = vadd.xlane.f32.xlu0 %v171
  %v173 = vpop.xlane.xlu0 %172
  %v174 = vsel %vm117, %v50, 0.0
  %v175 = vadd.f32 %v49, %v174
  %176 = vadd.xlane.f32.xlu0 %v175
  %v177 = vpop.xlane.xlu0 %176
  %v178 = vsel %vm117, %v52, 0.0
  %v179 = vadd.f32 %v51, %v178
  %180 = vadd.xlane.f32.xlu0 %v179
  %v181 = vpop.xlane.xlu0 %180
  %v182 = vmul.f32 %v21, %v21
  %v183 = vmul.f32 %v22, %v22
  %v184 = vmul.f32 %v23, %v23
  %v185 = vmul.f32 %v24, %v24
  %v186 = vmul.f32 %v25, %v25
  %v187 = vmul.f32 %v26, %v26
  %v188 = vmul.f32 %v27, %v27
  %v189 = vmul.f32 %v28, %v28
  %v190 = vmul.f32 %v29, %v29
  %v191 = vmul.f32 %v30, %v30
  %v192 = vmul.f32 %v31, %v31
  %v193 = vmul.f32 %v32, %v32
  %v194 = vmul.f32 %v33, %v33
  %v195 = vmul.f32 %v34, %v34
  %v196 = vmul.f32 %v35, %v35
  %v197 = vmul.f32 %v36, %v36
  %v198 = vmul.f32 %v37, %v37
  %v199 = vmul.f32 %v38, %v38
  %v200 = vmul.f32 %v39, %v39
  %v201 = vmul.f32 %v40, %v40
  %v202 = vmul.f32 %v41, %v41
  %v203 = vmul.f32 %v42, %v42
  %v204 = vmul.f32 %v43, %v43
  %v205 = vmul.f32 %v44, %v44
  %v206 = vmul.f32 %v45, %v45
  %v207 = vmul.f32 %v46, %v46
  %v208 = vmul.f32 %v47, %v47
  %v209 = vmul.f32 %v48, %v48
  %v210 = vmul.f32 %v49, %v49
  %v211 = vmul.f32 %v50, %v50
  %v212 = vmul.f32 %v51, %v51
  %v213 = vmul.f32 %v52, %v52
  %v214 = vsel %vm117, %v183, 0.0
  %v215 = vadd.f32 %v182, %v214
  %216 = vadd.xlane.f32.xlu0 %v215
  %v217 = vpop.xlane.xlu0 %216
  %v218 = vsel %vm117, %v185, 0.0
  %v219 = vadd.f32 %v184, %v218
  %220 = vadd.xlane.f32.xlu0 %v219
  %v221 = vpop.xlane.xlu0 %220
  %v222 = vsel %vm117, %v187, 0.0
  %v223 = vadd.f32 %v186, %v222
  %224 = vadd.xlane.f32.xlu0 %v223
  %v225 = vpop.xlane.xlu0 %224
  %v226 = vsel %vm117, %v189, 0.0
  %v227 = vadd.f32 %v188, %v226
  %228 = vadd.xlane.f32.xlu0 %v227
  %v229 = vpop.xlane.xlu0 %228
  %v230 = vsel %vm117, %v191, 0.0
  %v231 = vadd.f32 %v190, %v230
  %232 = vadd.xlane.f32.xlu0 %v231
  %v233 = vpop.xlane.xlu0 %232
  %v234 = vsel %vm117, %v193, 0.0
  %v235 = vadd.f32 %v192, %v234
  %236 = vadd.xlane.f32.xlu0 %v235
  %v237 = vpop.xlane.xlu0 %236
  %v238 = vsel %vm117, %v195, 0.0
  %v239 = vadd.f32 %v194, %v238
  %240 = vadd.xlane.f32.xlu0 %v239
  %v241 = vpop.xlane.xlu0 %240
  %v242 = vsel %vm117, %v197, 0.0
  %v243 = vadd.f32 %v196, %v242
  %244 = vadd.xlane.f32.xlu0 %v243
  %v245 = vpop.xlane.xlu0 %244
  %v246 = vsel %vm117, %v199, 0.0
  %v247 = vadd.f32 %v198, %v246
  %248 = vadd.xlane.f32.xlu0 %v247
  %v249 = vpop.xlane.xlu0 %248
  %v250 = vsel %vm117, %v201, 0.0
  %v251 = vadd.f32 %v200, %v250
  %252 = vadd.xlane.f32.xlu0 %v251
  %v253 = vpop.xlane.xlu0 %252
  %v254 = vsel %vm117, %v203, 0.0
  %v255 = vadd.f32 %v202, %v254
  %256 = vadd.xlane.f32.xlu0 %v255
  %v257 = vpop.xlane.xlu0 %256
  %v258 = vsel %vm117, %v205, 0.0
  %v259 = vadd.f32 %v204, %v258
  %260 = vadd.xlane.f32.xlu0 %v259
  %v261 = vpop.xlane.xlu0 %260
  %v262 = vsel %vm117, %v207, 0.0
  %v263 = vadd.f32 %v206, %v262
  %264 = vadd.xlane.f32.xlu0 %v263
  %v265 = vpop.xlane.xlu0 %264
  %v266 = vsel %vm117, %v209, 0.0
  %v267 = vadd.f32 %v208, %v266
  %268 = vadd.xlane.f32.xlu0 %v267
  %v269 = vpop.xlane.xlu0 %268
  %v270 = vsel %vm117, %v211, 0.0
  %v271 = vadd.f32 %v210, %v270
  %272 = vadd.xlane.f32.xlu0 %v271
  %v273 = vpop.xlane.xlu0 %272
  %v274 = vsel %vm117, %v213, 0.0
  %v275 = vadd.f32 %v212, %v274
  %276 = vadd.xlane.f32.xlu0 %v275
  %v277 = vpop.xlane.xlu0 %276
  %v278 = vrcp.pop 196.0
  %v279 = vmul.f32 %v121, %v278
  %v280 = vmul.f32 %v125, %v278
  %v281 = vmul.f32 %v129, %v278
  %v282 = vmul.f32 %v133, %v278
  %v283 = vmul.f32 %v137, %v278
  %v284 = vmul.f32 %v141, %v278
  %v285 = vmul.f32 %v145, %v278
  %v286 = vmul.f32 %v149, %v278
  %v287 = vmul.f32 %v153, %v278
  %v288 = vmul.f32 %v157, %v278
  %v289 = vmul.f32 %v161, %v278
  %v290 = vmul.f32 %v165, %v278
  %v291 = vmul.f32 %v169, %v278
  %v292 = vmul.f32 %v173, %v278
  %v293 = vmul.f32 %v177, %v278
  %v294 = vmul.f32 %v181, %v278
  %v295 = vmul.f32 %v217, %v278
  %v296 = vmul.f32 %v221, %v278
  %v297 = vmul.f32 %v225, %v278
  %v298 = vmul.f32 %v229, %v278
  %v299 = vmul.f32 %v233, %v278
  %v300 = vmul.f32 %v237, %v278
  %v301 = vmul.f32 %v241, %v278
  %v302 = vmul.f32 %v245, %v278
  %v303 = vmul.f32 %v249, %v278
  %v304 = vmul.f32 %v253, %v278
  %v305 = vmul.f32 %v257, %v278
  %v306 = vmul.f32 %v261, %v278
  %v307 = vmul.f32 %v265, %v278
  %v308 = vmul.f32 %v269, %v278
  %v309 = vmul.f32 %v273, %v278
  %v310 = vmul.f32 %v277, %v278
  %v311 = vmul.f32 %v279, %v279
  %v312 = vmul.f32 %v280, %v280
  %v313 = vmul.f32 %v281, %v281
  %v314 = vmul.f32 %v282, %v282
  %v315 = vmul.f32 %v283, %v283
  %v316 = vmul.f32 %v284, %v284
  %v317 = vmul.f32 %v285, %v285
  %v318 = vmul.f32 %v286, %v286
  %v319 = vmul.f32 %v287, %v287
  %v320 = vmul.f32 %v288, %v288
  %v321 = vmul.f32 %v289, %v289
  %v322 = vmul.f32 %v290, %v290
  %v323 = vmul.f32 %v291, %v291
  %v324 = vmul.f32 %v292, %v292
  %v325 = vmul.f32 %v293, %v293
  %v326 = vmul.f32 %v294, %v294
  %v327 = vsub.f32 %v295, %v311
  %v328 = vsub.f32 %v296, %v312
  %v329 = vsub.f32 %v297, %v313
  %v330 = vsub.f32 %v298, %v314
  %v331 = vsub.f32 %v299, %v315
  %v332 = vsub.f32 %v300, %v316
  %v333 = vsub.f32 %v301, %v317
  %v334 = vsub.f32 %v302, %v318
  %v335 = vsub.f32 %v303, %v319
  %v336 = vsub.f32 %v304, %v320
  %v337 = vsub.f32 %v305, %v321
  %v338 = vsub.f32 %v306, %v322
  %v339 = vsub.f32 %v307, %v323
  %v340 = vsub.f32 %v308, %v324
  %v341 = vsub.f32 %v309, %v325
  %v342 = vsub.f32 %v310, %v326
  %v343 = vadd.f32 %v327, 1e-05
  %v344 = vadd.f32 %v328, 1e-05
  %v345 = vadd.f32 %v329, 1e-05
  %v346 = vadd.f32 %v330, 1e-05
  %v347 = vadd.f32 %v331, 1e-05
  %v348 = vadd.f32 %v332, 1e-05
  %v349 = vadd.f32 %v333, 1e-05
  %v350 = vadd.f32 %v334, 1e-05
  %v351 = vadd.f32 %v335, 1e-05
  %v352 = vadd.f32 %v336, 1e-05
  %v353 = vadd.f32 %v337, 1e-05
  %v354 = vadd.f32 %v338, 1e-05
  %v355 = vadd.f32 %v339, 1e-05
  %v356 = vadd.f32 %v340, 1e-05
  %v357 = vadd.f32 %v341, 1e-05
  %v358 = vadd.f32 %v342, 1e-05
  %v359 = vrsqrt.pop %v343
  %v360 = vrsqrt.pop %v344
  %v361 = vrsqrt.pop %v345
  %v362 = vrsqrt.pop %v346
  %v363 = vrsqrt.pop %v347
  %v364 = vrsqrt.pop %v348
  %v365 = vrsqrt.pop %v349
  %v366 = vrsqrt.pop %v350
  %v367 = vrsqrt.pop %v351
  %v368 = vrsqrt.pop %v352
  %v369 = vrsqrt.pop %v353
  %v370 = vrsqrt.pop %v354
  %v371 = vrsqrt.pop %v355
  %v372 = vrsqrt.pop %v356
  %v373 = vrsqrt.pop %v357
  %v374 = vrsqrt.pop %v358
  %v375 = vmul.f32 %v85, %v359
  %v376 = vmul.f32 %v86, %v360
  %v377 = vmul.f32 %v87, %v361
  %v378 = vmul.f32 %v88, %v362
  %v379 = vmul.f32 %v89, %v363
  %v380 = vmul.f32 %v90, %v364
  %v381 = vmul.f32 %v91, %v365
  %v382 = vmul.f32 %v92, %v366
  %v383 = vmul.f32 %v93, %v367
  %v384 = vmul.f32 %v94, %v368
  %v385 = vmul.f32 %v95, %v369
  %v386 = vmul.f32 %v96, %v370
  %v387 = vmul.f32 %v97, %v371
  %v388 = vmul.f32 %v98, %v372
  %v389 = vmul.f32 %v99, %v373
  %v390 = vmul.f32 %v100, %v374
  %v391 = vmul.f32 %v279, %v375
  %v392 = vmul.f32 %v280, %v376
  %v393 = vmul.f32 %v281, %v377
  %v394 = vmul.f32 %v282, %v378
  %v395 = vmul.f32 %v283, %v379
  %v396 = vmul.f32 %v284, %v380
  %v397 = vmul.f32 %v285, %v381
  %v398 = vmul.f32 %v286, %v382
  %v399 = vmul.f32 %v287, %v383
  %v400 = vmul.f32 %v288, %v384
  %v401 = vmul.f32 %v289, %v385
  %v402 = vmul.f32 %v290, %v386
  %v403 = vmul.f32 %v291, %v387
  %v404 = vmul.f32 %v292, %v388
  %v405 = vmul.f32 %v293, %v389
  %v406 = vmul.f32 %v294, %v390
  %v407 = vsub.f32 %v101, %v391
  %v408 = vsub.f32 %v102, %v392
  %v409 = vsub.f32 %v103, %v393
  %v410 = vsub.f32 %v104, %v394
  %v411 = vsub.f32 %v105, %v395
  %v412 = vsub.f32 %v106, %v396
  %v413 = vsub.f32 %v107, %v397
  %v414 = vsub.f32 %v108, %v398
  %v415 = vsub.f32 %v109, %v399
  %v416 = vsub.f32 %v110, %v400
  %v417 = vsub.f32 %v111, %v401
  %v418 = vsub.f32 %v112, %v402
  %v419 = vsub.f32 %v113, %v403
  %v420 = vsub.f32 %v114, %v404
  %v421 = vsub.f32 %v115, %v405
  %v422 = vsub.f32 %v116, %v406
  %424 = vset.pattern.permute.xlu0 0
  %425 = vperm.xlu0 %424, %v375
  %v426 = vpop.permute.xlu0 %425
  %429 = vset.pattern.permute.xlu0 0
  %430 = vperm.xlu0 %429, %v376
  %v431 = vpop.permute.xlu0 %430
  %434 = vset.pattern.permute.xlu0 0
  %435 = vperm.xlu0 %434, %v377
  %v436 = vpop.permute.xlu0 %435
  %439 = vset.pattern.permute.xlu0 0
  %440 = vperm.xlu0 %439, %v378
  %v441 = vpop.permute.xlu0 %440
  %444 = vset.pattern.permute.xlu0 0
  %445 = vperm.xlu0 %444, %v379
  %v446 = vpop.permute.xlu0 %445
  %449 = vset.pattern.permute.xlu0 0
  %450 = vperm.xlu0 %449, %v380
  %v451 = vpop.permute.xlu0 %450
  %454 = vset.pattern.permute.xlu0 0
  %455 = vperm.xlu0 %454, %v381
  %v456 = vpop.permute.xlu0 %455
  %459 = vset.pattern.permute.xlu0 0
  %460 = vperm.xlu0 %459, %v382
  %v461 = vpop.permute.xlu0 %460
  %464 = vset.pattern.permute.xlu0 0
  %465 = vperm.xlu0 %464, %v383
  %v466 = vpop.permute.xlu0 %465
  %469 = vset.pattern.permute.xlu0 0
  %470 = vperm.xlu0 %469, %v384
  %v471 = vpop.permute.xlu0 %470
  %474 = vset.pattern.permute.xlu0 0
  %475 = vperm.xlu0 %474, %v385
  %v476 = vpop.permute.xlu0 %475
  %479 = vset.pattern.permute.xlu0 0
  %480 = vperm.xlu0 %479, %v386
  %v481 = vpop.permute.xlu0 %480
  %484 = vset.pattern.permute.xlu0 0
  %485 = vperm.xlu0 %484, %v387
  %v486 = vpop.permute.xlu0 %485
  %489 = vset.pattern.permute.xlu0 0
  %490 = vperm.xlu0 %489, %v388
  %v491 = vpop.permute.xlu0 %490
  %494 = vset.pattern.permute.xlu0 0
  %495 = vperm.xlu0 %494, %v389
  %v496 = vpop.permute.xlu0 %495
  %499 = vset.pattern.permute.xlu0 0
  %500 = vperm.xlu0 %499, %v390
  %v501 = vpop.permute.xlu0 %500
  %v503 = vmul.f32 %v21, %v426
  %v504 = vmul.f32 %v22, %v426
  %v505 = vmul.f32 %v23, %v431
  %v506 = vmul.f32 %v24, %v431
  %v507 = vmul.f32 %v25, %v436
  %v508 = vmul.f32 %v26, %v436
  %v509 = vmul.f32 %v27, %v441
  %v510 = vmul.f32 %v28, %v441
  %v511 = vmul.f32 %v29, %v446
  %v512 = vmul.f32 %v30, %v446
  %v513 = vmul.f32 %v31, %v451
  %v514 = vmul.f32 %v32, %v451
  %v515 = vmul.f32 %v33, %v456
  %v516 = vmul.f32 %v34, %v456
  %v517 = vmul.f32 %v35, %v461
  %v518 = vmul.f32 %v36, %v461
  %v519 = vmul.f32 %v37, %v466
  %v520 = vmul.f32 %v38, %v466
  %v521 = vmul.f32 %v39, %v471
  %v522 = vmul.f32 %v40, %v471
  %v523 = vmul.f32 %v41, %v476
  %v524 = vmul.f32 %v42, %v476
  %v525 = vmul.f32 %v43, %v481
  %v526 = vmul.f32 %v44, %v481
  %v527 = vmul.f32 %v45, %v486
  %v528 = vmul.f32 %v46, %v486
  %v529 = vmul.f32 %v47, %v491
  %v530 = vmul.f32 %v48, %v491
  %v531 = vmul.f32 %v49, %v496
  %v532 = vmul.f32 %v50, %v496
  %v533 = vmul.f32 %v51, %v501
  %v534 = vmul.f32 %v52, %v501
  %536 = vset.pattern.permute.xlu0 0
  %537 = vperm.xlu0 %536, %v407
  %v538 = vpop.permute.xlu0 %537
  %541 = vset.pattern.permute.xlu0 0
  %542 = vperm.xlu0 %541, %v408
  %v543 = vpop.permute.xlu0 %542
  %546 = vset.pattern.permute.xlu0 0
  %547 = vperm.xlu0 %546, %v409
  %v548 = vpop.permute.xlu0 %547
  %551 = vset.pattern.permute.xlu0 0
  %552 = vperm.xlu0 %551, %v410
  %v553 = vpop.permute.xlu0 %552
  %556 = vset.pattern.permute.xlu0 0
  %557 = vperm.xlu0 %556, %v411
  %v558 = vpop.permute.xlu0 %557
  %561 = vset.pattern.permute.xlu0 0
  %562 = vperm.xlu0 %561, %v412
  %v563 = vpop.permute.xlu0 %562
  %566 = vset.pattern.permute.xlu0 0
  %567 = vperm.xlu0 %566, %v413
  %v568 = vpop.permute.xlu0 %567
  %571 = vset.pattern.permute.xlu0 0
  %572 = vperm.xlu0 %571, %v414
  %v573 = vpop.permute.xlu0 %572
  %576 = vset.pattern.permute.xlu0 0
  %577 = vperm.xlu0 %576, %v415
  %v578 = vpop.permute.xlu0 %577
  %581 = vset.pattern.permute.xlu0 0
  %582 = vperm.xlu0 %581, %v416
  %v583 = vpop.permute.xlu0 %582
  %586 = vset.pattern.permute.xlu0 0
  %587 = vperm.xlu0 %586, %v417
  %v588 = vpop.permute.xlu0 %587
  %591 = vset.pattern.permute.xlu0 0
  %592 = vperm.xlu0 %591, %v418
  %v593 = vpop.permute.xlu0 %592
  %596 = vset.pattern.permute.xlu0 0
  %597 = vperm.xlu0 %596, %v419
  %v598 = vpop.permute.xlu0 %597
  %601 = vset.pattern.permute.xlu0 0
  %602 = vperm.xlu0 %601, %v420
  %v603 = vpop.permute.xlu0 %602
  %606 = vset.pattern.permute.xlu0 0
  %607 = vperm.xlu0 %606, %v421
  %v608 = vpop.permute.xlu0 %607
  %611 = vset.pattern.permute.xlu0 0
  %612 = vperm.xlu0 %611, %v422
  %v613 = vpop.permute.xlu0 %612
  %v615 = vadd.f32 %v503, %v538
  %v616 = vadd.f32 %v504, %v538
  %v617 = vadd.f32 %v505, %v543
  %v618 = vadd.f32 %v506, %v543
  %v619 = vadd.f32 %v507, %v548
  %v620 = vadd.f32 %v508, %v548
  %v621 = vadd.f32 %v509, %v553
  %v622 = vadd.f32 %v510, %v553
  %v623 = vadd.f32 %v511, %v558
  %v624 = vadd.f32 %v512, %v558
  %v625 = vadd.f32 %v513, %v563
  %v626 = vadd.f32 %v514, %v563
  %v627 = vadd.f32 %v515, %v568
  %v628 = vadd.f32 %v516, %v568
  %v629 = vadd.f32 %v517, %v573
  %v630 = vadd.f32 %v518, %v573
  %v631 = vadd.f32 %v519, %v578
  %v632 = vadd.f32 %v520, %v578
  %v633 = vadd.f32 %v521, %v583
  %v634 = vadd.f32 %v522, %v583
  %v635 = vadd.f32 %v523, %v588
  %v636 = vadd.f32 %v524, %v588
  %v637 = vadd.f32 %v525, %v593
  %v638 = vadd.f32 %v526, %v593
  %v639 = vadd.f32 %v527, %v598
  %v640 = vadd.f32 %v528, %v598
  %v641 = vadd.f32 %v529, %v603
  %v642 = vadd.f32 %v530, %v603
  %v643 = vadd.f32 %v531, %v608
  %v644 = vadd.f32 %v532, %v608
  %v645 = vadd.f32 %v533, %v613
  %v646 = vadd.f32 %v534, %v613
  %v647 = vadd.f32 %v615, %v53
  %v648 = vadd.f32 %v616, %v54
  %v649 = vadd.f32 %v617, %v55
  %v650 = vadd.f32 %v618, %v56
  %v651 = vadd.f32 %v619, %v57
  %v652 = vadd.f32 %v620, %v58
  %v653 = vadd.f32 %v621, %v59
  %v654 = vadd.f32 %v622, %v60
  %v655 = vadd.f32 %v623, %v61
  %v656 = vadd.f32 %v624, %v62
  %v657 = vadd.f32 %v625, %v63
  %v658 = vadd.f32 %v626, %v64
  %v659 = vadd.f32 %v627, %v65
  %v660 = vadd.f32 %v628, %v66
  %v661 = vadd.f32 %v629, %v67
  %v662 = vadd.f32 %v630, %v68
  %v663 = vadd.f32 %v631, %v69
  %v664 = vadd.f32 %v632, %v70
  %v665 = vadd.f32 %v633, %v71
  %v666 = vadd.f32 %v634, %v72
  %v667 = vadd.f32 %v635, %v73
  %v668 = vadd.f32 %v636, %v74
  %v669 = vadd.f32 %v637, %v75
  %v670 = vadd.f32 %v638, %v76
  %v671 = vadd.f32 %v639, %v77
  %v672 = vadd.f32 %v640, %v78
  %v673 = vadd.f32 %v641, %v79
  %v674 = vadd.f32 %v642, %v80
  %v675 = vadd.f32 %v643, %v81
  %v676 = vadd.f32 %v644, %v82
  %v677 = vadd.f32 %v645, %v83
  %v678 = vadd.f32 %v646, %v84
  %v679 = vld [vmem:[%s4] sm:$0xff]
  %v680 = vld [vmem:[%s4 + $0x8] sm:$0xff]
  %v681 = vld [vmem:[%s4 + $0x10] sm:$0xff]
  %v682 = vld [vmem:[%s4 + $0x18] sm:$0xff]
  %v683 = vld [vmem:[%s4 + $0x20] sm:$0xff]
  %v684 = vld [vmem:[%s4 + $0x28] sm:$0xff]
  %v685 = vld [vmem:[%s4 + $0x30] sm:$0xff]
  %v686 = vld [vmem:[%s4 + $0x38] sm:$0xff]
  %v687 = vld [vmem:[%s4 + $0x40] sm:$0xff]
  %v688 = vld [vmem:[%s4 + $0x48] sm:$0xff]
  %v689 = vld [vmem:[%s4 + $0x50] sm:$0xff]
  %v690 = vld [vmem:[%s4 + $0x58] sm:$0xff]
  %v691 = vld [vmem:[%s4 + $0x60] sm:$0xff]
  %v692 = vld [vmem:[%s4 + $0x68] sm:$0xff]
  %v693 = vld [vmem:[%s4 + $0x70] sm:$0xff]
  %v694 = vld [vmem:[%s4 + $0x78] sm:$0xff]
  %v695 = vld [vmem:[%s4 + $0x80] sm:$0xff]
  %v696 = vld [vmem:[%s4 + $0x88] sm:$0xff]
  %v697 = vld [vmem:[%s4 + $0x90] sm:$0xff]
  %v698 = vld [vmem:[%s4 + $0x98] sm:$0xff]
  %v699 = vld [vmem:[%s4 + $0xa0] sm:$0xff]
  %v700 = vld [vmem:[%s4 + $0xa8] sm:$0xff]
  %v701 = vld [vmem:[%s4 + $0xb0] sm:$0xff]
  %v702 = vld [vmem:[%s4 + $0xb8] sm:$0xff]
  %v703 = vld [vmem:[%s4 + $0xc0] sm:$0xff]
  %v704 = vld [vmem:[%s4 + $0xc8] sm:$0xff]
  %v705 = vld [vmem:[%s4 + $0xd0] sm:$0xff]
  %v706 = vld [vmem:[%s4 + $0xd8] sm:$0xff]
  %v707 = vld [vmem:[%s4 + $0xe0] sm:$0xff]
  %v708 = vld [vmem:[%s4 + $0xe8] sm:$0xff]
  %v709 = vld [vmem:[%s4 + $0xf0] sm:$0xff]
  %v710 = vld [vmem:[%s4 + $0xf8] sm:$0xff]
  %v711 = vld [vmem:[%s4 + $0x100] sm:$0xff]
  %v712 = vld [vmem:[%s4 + $0x108] sm:$0xff]
  %v713 = vld [vmem:[%s4 + $0x110] sm:$0xff]
  %v714 = vld [vmem:[%s4 + $0x118] sm:$0xff]
  %v715 = vld [vmem:[%s4 + $0x120] sm:$0xff]
  %v716 = vld [vmem:[%s4 + $0x128] sm:$0xff]
  %v717 = vld [vmem:[%s4 + $0x130] sm:$0xff]
  %v718 = vld [vmem:[%s4 + $0x138] sm:$0xff]
  %v719 = vld [vmem:[%s4 + $0x140] sm:$0xff]
  %v720 = vld [vmem:[%s4 + $0x148] sm:$0xff]
  %v721 = vld [vmem:[%s4 + $0x150] sm:$0xff]
  %v722 = vld [vmem:[%s4 + $0x158] sm:$0xff]
  %v723 = vld [vmem:[%s4 + $0x160] sm:$0xff]
  %v724 = vld [vmem:[%s4 + $0x168] sm:$0xff]
  %v725 = vld [vmem:[%s4 + $0x170] sm:$0xff]
  %v726 = vld [vmem:[%s4 + $0x178] sm:$0xff]
  %v727 = vld [vmem:[%s4 + $0x180] sm:$0xff]
  %v728 = vld [vmem:[%s4 + $0x188] sm:$0xff]
  %v729 = vld [vmem:[%s4 + $0x190] sm:$0xff]
  %v730 = vld [vmem:[%s4 + $0x198] sm:$0xff]
  %v731 = vld [vmem:[%s4 + $0x1a0] sm:$0xff]
  %v732 = vld [vmem:[%s4 + $0x1a8] sm:$0xff]
  %v733 = vld [vmem:[%s4 + $0x1b0] sm:$0xff]
  %v734 = vld [vmem:[%s4 + $0x1b8] sm:$0xff]
  %v735 = vld [vmem:[%s4 + $0x1c0] sm:$0xff]
  %v736 = vld [vmem:[%s4 + $0x1c8] sm:$0xff]
  %v737 = vld [vmem:[%s4 + $0x1d0] sm:$0xff]
  %v738 = vld [vmem:[%s4 + $0x1d8] sm:$0xff]
  %v739 = vld [vmem:[%s4 + $0x1e0] sm:$0xff]
  %v740 = vld [vmem:[%s4 + $0x1e8] sm:$0xff]
  %v741 = vld [vmem:[%s4 + $0x1f0] sm:$0xff]
  %v742 = vld [vmem:[%s4 + $0x1f8] sm:$0xff]
  %v743 = vld [vmem:[%s4 + $0x200] sm:$0xff]
  %v744 = vld [vmem:[%s4 + $0x208] sm:$0xff]
  %v745 = vld [vmem:[%s4 + $0x210] sm:$0xff]
  %v746 = vld [vmem:[%s4 + $0x218] sm:$0xff]
  %v747 = vld [vmem:[%s4 + $0x220] sm:$0xff]
  %v748 = vld [vmem:[%s4 + $0x228] sm:$0xff]
  %v749 = vld [vmem:[%s4 + $0x230] sm:$0xff]
  %v750 = vld [vmem:[%s4 + $0x238] sm:$0xff]
  %v751 = vld [vmem:[%s4 + $0x240] sm:$0xff]
  %v752 = vld [vmem:[%s4 + $0x248] sm:$0xff]
  %v753 = vld [vmem:[%s4 + $0x250] sm:$0xff]
  %v754 = vld [vmem:[%s4 + $0x258] sm:$0xff]
  %v755 = vld [vmem:[%s4 + $0x260] sm:$0xff]
  %v756 = vld [vmem:[%s4 + $0x268] sm:$0xff]
  %v757 = vld [vmem:[%s4 + $0x270] sm:$0xff]
  %v758 = vld [vmem:[%s4 + $0x278] sm:$0xff]
  %v759 = vld [vmem:[%s4 + $0x280] sm:$0xff]
  %v760 = vld [vmem:[%s4 + $0x288] sm:$0xff]
  %v761 = vld [vmem:[%s4 + $0x290] sm:$0xff]
  %v762 = vld [vmem:[%s4 + $0x298] sm:$0xff]
  %v763 = vld [vmem:[%s4 + $0x2a0] sm:$0xff]
  %v764 = vld [vmem:[%s4 + $0x2a8] sm:$0xff]
  %v765 = vld [vmem:[%s4 + $0x2b0] sm:$0xff]
  %v766 = vld [vmem:[%s4 + $0x2b8] sm:$0xff]
  %v767 = vld [vmem:[%s4 + $0x2c0] sm:$0xff]
  %v768 = vld [vmem:[%s4 + $0x2c8] sm:$0xff]
  %v769 = vld [vmem:[%s4 + $0x2d0] sm:$0xff]
  %v770 = vld [vmem:[%s4 + $0x2d8] sm:$0xff]
  %v771 = vld [vmem:[%s4 + $0x2e0] sm:$0xff]
  %v772 = vld [vmem:[%s4 + $0x2e8] sm:$0xff]
  %v773 = vld [vmem:[%s4 + $0x2f0] sm:$0xff]
  %v774 = vld [vmem:[%s4 + $0x2f8] sm:$0xff]
  %v775 = vpack.c.bf16 %v680, %v679
  %v776 = vpack.c.bf16 %v682, %v681
  %v777 = vpack.c.bf16 %v684, %v683
  %v778 = vpack.c.bf16 %v686, %v685
  %v779 = vpack.c.bf16 %v688, %v687
  %v780 = vpack.c.bf16 %v690, %v689
  %v781 = vpack.c.bf16 %v692, %v691
  %v782 = vpack.c.bf16 %v694, %v693
  %v783 = vpack.c.bf16 %v696, %v695
  %v784 = vpack.c.bf16 %v698, %v697
  %v785 = vpack.c.bf16 %v700, %v699
  %v786 = vpack.c.bf16 %v702, %v701
  %v787 = vpack.c.bf16 %v704, %v703
  %v788 = vpack.c.bf16 %v706, %v705
  %v789 = vpack.c.bf16 %v708, %v707
  %v790 = vpack.c.bf16 %v710, %v709
  %v791 = vpack.c.bf16 %v712, %v711
  %v792 = vpack.c.bf16 %v714, %v713
  %v793 = vpack.c.bf16 %v716, %v715
  %v794 = vpack.c.bf16 %v718, %v717
  %v795 = vpack.c.bf16 %v720, %v719
  %v796 = vpack.c.bf16 %v722, %v721
  %v797 = vpack.c.bf16 %v724, %v723
  %v798 = vpack.c.bf16 %v726, %v725
  %v799 = vpack.c.bf16 %v728, %v727
  %v800 = vpack.c.bf16 %v730, %v729
  %v801 = vpack.c.bf16 %v732, %v731
  %v802 = vpack.c.bf16 %v734, %v733
  %v803 = vpack.c.bf16 %v736, %v735
  %v804 = vpack.c.bf16 %v738, %v737
  %v805 = vpack.c.bf16 %v740, %v739
  %v806 = vpack.c.bf16 %v742, %v741
  %v807 = vpack.c.bf16 %v744, %v743
  %v808 = vpack.c.bf16 %v746, %v745
  %v809 = vpack.c.bf16 %v748, %v747
  %v810 = vpack.c.bf16 %v750, %v749
  %v811 = vpack.c.bf16 %v752, %v751
  %v812 = vpack.c.bf16 %v754, %v753
  %v813 = vpack.c.bf16 %v756, %v755
  %v814 = vpack.c.bf16 %v758, %v757
  %v815 = vpack.c.bf16 %v760, %v759
  %v816 = vpack.c.bf16 %v762, %v761
  %v817 = vpack.c.bf16 %v764, %v763
  %v818 = vpack.c.bf16 %v766, %v765
  %v819 = vpack.c.bf16 %v768, %v767
  %v820 = vpack.c.bf16 %v770, %v769
  %v821 = vpack.c.bf16 %v772, %v771
  %v822 = vpack.c.bf16 %v774, %v773
  %v823 = vpack.c.bf16 %v649, %v647
  %v824 = vpack.c.bf16 %v650, %v648
  %v825 = vpack.c.bf16 %v653, %v651
  %v826 = vpack.c.bf16 %v654, %v652
  %v827 = vpack.c.bf16 %v657, %v655
  %v828 = vpack.c.bf16 %v658, %v656
  %v829 = vpack.c.bf16 %v661, %v659
  %v830 = vpack.c.bf16 %v662, %v660
  %v831 = vpack.c.bf16 %v665, %v663
  %v832 = vpack.c.bf16 %v666, %v664
  %v833 = vpack.c.bf16 %v669, %v667
  %v834 = vpack.c.bf16 %v670, %v668
  %v835 = vpack.c.bf16 %v673, %v671
  %v836 = vpack.c.bf16 %v674, %v672
  %v837 = vpack.c.bf16 %v677, %v675
  %v838 = vpack.c.bf16 %v678, %v676
  %839 = vmatprep.subr.bf16.mxu0 %v824
  %840 = vmatpush1.bf16.msra.mxu0 %v823
  %841 = vmatprep.subr.bf16.mxu0 %v826
  %842 = vmatpush1.bf16.msra.mxu0 %v825
  %843 = vmatprep.subr.bf16.mxu0 %v828
  %844 = vmatpush1.bf16.msra.mxu0 %v827
  %845 = vmatprep.subr.bf16.mxu0 %v830
  %846 = vmatpush1.bf16.msra.mxu0 %v829
  %847 = vmatprep.subr.bf16.mxu0 %v832
  %848 = vmatpush1.bf16.msra.mxu0 %v831
  %849 = vmatprep.subr.bf16.mxu0 %v834
  %850 = vmatpush1.bf16.msra.mxu0 %v833
  %851 = vmatprep.subr.bf16.mxu0 %v836
  %852 = vmatpush1.bf16.msra.mxu0 %v835
  %853 = vmatprep.subr.bf16.mxu0 %v838
  %854 = vmatpush1.bf16.msra.mxu0 %v837
  %855 = vmatprep.subr.bf16.mxu0 0
  %856 = vmatpush1.bf16.msra.mxu0 0
  %857 = vmatprep.subr.bf16.mxu0 0
  %858 = vmatpush1.bf16.msra.mxu0 0
  %859 = vmatprep.subr.bf16.mxu0 0
  %860 = vmatpush1.bf16.msra.mxu0 0
  %861 = vmatprep.subr.bf16.mxu0 0
  %862 = vmatpush1.bf16.msra.mxu0 0
  %863 = vmatprep.subr.bf16.mxu0 0
  %864 = vmatpush1.bf16.msra.mxu0 0
  %865 = vmatprep.subr.bf16.mxu0 0
  %866 = vmatpush1.bf16.msra.mxu0 0
  %867 = vmatprep.subr.bf16.mxu0 0
  %868 = vmatpush1.bf16.msra.mxu0 0
  %869 = vmatprep.subr.bf16.mxu0 0
  %870 = vmatpush1.bf16.msra.mxu0 0
  %871 = vmatprep.mubr.bf16.mxu0 0
  %872 = vmatmul.mubr.bf16.gmra.mrb[0].mxu0 %v775
  %v873 = vpop.f32.mrb[0].mxu0
  %v874 = vadd.f32 0.0, %v873
  %v875 = vpop.f32.mrb[0].mxu0
  %v876 = vadd.f32 0.0, %v875
  %v877 = vpop.f32.mrb[0].mxu0
  %v878 = vadd.f32 0.0, %v877
  %v879 = vpop.f32.mrb[0].mxu0
  %v880 = vadd.f32 0.0, %v879
  %881 = vmatprep.mubr.bf16.mxu0 0
  %882 = vmatmul.mubr.bf16.gmra.mrb[0].mxu0 %v776
  %v883 = vpop.f32.mrb[0].mxu0
  %v884 = vadd.f32 0.0, %v883
  %v885 = vpop.f32.mrb[0].mxu0
  %v886 = vadd.f32 0.0, %v885
  %v887 = vpop.f32.mrb[0].mxu0
  %v888 = vadd.f32 0.0, %v887
  %v889 = vpop.f32.mrb[0].mxu0
  %v890 = vadd.f32 0.0, %v889
  %891 = vmatprep.mubr.bf16.mxu0 0
  %892 = vmatmul.mubr.bf16.gmra.mrb[0].mxu0 %v777
  %v893 = vpop.f32.mrb[0].mxu0
  %v894 = vadd.f32 0.0, %v893
  %v895 = vpop.f32.mrb[0].mxu0
  %v896 = vadd.f32 0.0, %v895
  %v897 = vpop.f32.mrb[0].mxu0
  %v898 = vadd.f32 0.0, %v897
  %v899 = vpop.f32.mrb[0].mxu0
  %v900 = vadd.f32 0.0, %v899
  %901 = vmatprep.mubr.bf16.mxu0 0
  %902 = vmatmul.mubr.bf16.gmra.mrb[0].mxu0 %v778
  %v903 = vpop.f32.mrb[0].mxu0
  %v904 = vadd.f32 0.0, %v903
  %v905 = vpop.f32.mrb[0].mxu0
  %v906 = vadd.f32 0.0, %v905
  %v907 = vpop.f32.mrb[0].mxu0
  %v908 = vadd.f32 0.0, %v907
  %v909 = vpop.f32.mrb[0].mxu0
  %v910 = vadd.f32 0.0, %v909
  %911 = vmatprep.mubr.bf16.mxu0 0
  %912 = vmatmul.mubr.bf16.gmra.mrb[0].mxu0 %v779
  %v913 = vpop.f32.mrb[0].mxu0
  %v914 = vadd.f32 0.0, %v913
  %v915 = vpop.f32.mrb[0].mxu0
  %v916 = vadd.f32 0.0, %v915
  %v917 = vpop.f32.mrb[0].mxu0
  %v918 = vadd.f32 0.0, %v917
  %v919 = vpop.f32.mrb[0].mxu0
  %v920 = vadd.f32 0.0, %v919
  %921 = vmatprep.mubr.bf16.mxu0 0
  %922 = vmatmul.mubr.bf16.gmra.mrb[0].mxu0 %v780
  %v923 = vpop.f32.mrb[0].mxu0
  %v924 = vadd.f32 0.0, %v923
  %v925 = vpop.f32.mrb[0].mxu0
  %v926 = vadd.f32 0.0, %v925
  %v927 = vpop.f32.mrb[0].mxu0
  %v928 = vadd.f32 0.0, %v927
  %v929 = vpop.f32.mrb[0].mxu0
  %v930 = vadd.f32 0.0, %v929
  %931 = vmatprep.mubr.bf16.mxu0 0
  %932 = vmatmul.mubr.bf16.gmra.mrb[0].mxu0 %v781
  %v933 = vpop.f32.mrb[0].mxu0
  %v934 = vadd.f32 0.0, %v933
  %v935 = vpop.f32.mrb[0].mxu0
  %v936 = vadd.f32 0.0, %v935
  %v937 = vpop.f32.mrb[0].mxu0
  %v938 = vadd.f32 0.0, %v937
  %v939 = vpop.f32.mrb[0].mxu0
  %v940 = vadd.f32 0.0, %v939
  %941 = vmatprep.mubr.bf16.mxu0 0
  %942 = vmatmul.mubr.bf16.gmra.mrb[0].mxu0 %v782
  %v943 = vpop.f32.mrb[0].mxu0
  %v944 = vadd.f32 0.0, %v943
  %v945 = vpop.f32.mrb[0].mxu0
  %v946 = vadd.f32 0.0, %v945
  %v947 = vpop.f32.mrb[0].mxu0
  %v948 = vadd.f32 0.0, %v947
  %v949 = vpop.f32.mrb[0].mxu0
  %v950 = vadd.f32 0.0, %v949
  %951 = vmatprep.mubr.bf16.mxu0 0
  %952 = vmatmul.mubr.bf16.gmra.mrb[0].mxu0 %v783
  %v953 = vpop.f32.mrb[0].mxu0
  %v954 = vadd.f32 0.0, %v953
  %v955 = vpop.f32.mrb[0].mxu0
  %v956 = vadd.f32 0.0, %v955
  %v957 = vpop.f32.mrb[0].mxu0
  %v958 = vadd.f32 0.0, %v957
  %v959 = vpop.f32.mrb[0].mxu0
  %v960 = vadd.f32 0.0, %v959
  %961 = vmatprep.mubr.bf16.mxu0 0
  %962 = vmatmul.mubr.bf16.gmra.mrb[0].mxu0 %v784
  %v963 = vpop.f32.mrb[0].mxu0
  %v964 = vadd.f32 0.0, %v963
  %v965 = vpop.f32.mrb[0].mxu0
  %v966 = vadd.f32 0.0, %v965
  %v967 = vpop.f32.mrb[0].mxu0
  %v968 = vadd.f32 0.0, %v967
  %v969 = vpop.f32.mrb[0].mxu0
  %v970 = vadd.f32 0.0, %v969
  %971 = vmatprep.mubr.bf16.mxu0 0
  %972 = vmatmul.mubr.bf16.gmra.mrb[0].mxu0 %v785
  %v973 = vpop.f32.mrb[0].mxu0
  %v974 = vadd.f32 0.0, %v973
  %v975 = vpop.f32.mrb[0].mxu0
  %v976 = vadd.f32 0.0, %v975
  %v977 = vpop.f32.mrb[0].mxu0
  %v978 = vadd.f32 0.0, %v977
  %v979 = vpop.f32.mrb[0].mxu0
  %v980 = vadd.f32 0.0, %v979
  %981 = vmatprep.mubr.bf16.mxu0 0
  %982 = vmatmul.mubr.bf16.gmra.mrb[0].mxu0 %v786
  %v983 = vpop.f32.mrb[0].mxu0
  %v984 = vadd.f32 0.0, %v983
  %v985 = vpop.f32.mrb[0].mxu0
  %v986 = vadd.f32 0.0, %v985
  %v987 = vpop.f32.mrb[0].mxu0
  %v988 = vadd.f32 0.0, %v987
  %v989 = vpop.f32.mrb[0].mxu0
  %v990 = vadd.f32 0.0, %v989
  %991 = vmatprep.mubr.bf16.mxu0 0
  %992 = vmatmul.mubr.bf16.gmra.mrb[0].mxu0 %v787
  %v993 = vpop.f32.mrb[0].mxu0
  %v994 = vadd.f32 0.0, %v993
  %v995 = vpop.f32.mrb[0].mxu0
  %v996 = vadd.f32 0.0, %v995
  %v997 = vpop.f32.mrb[0].mxu0
  %v998 = vadd.f32 0.0, %v997
  %v999 = vpop.f32.mrb[0].mxu0
  %v1000 = vadd.f32 0.0, %v999
  %1001 = vmatprep.mubr.bf16.mxu0 0
  %1002 = vmatmul.mubr.bf16.gmra.mrb[0].mxu0 %v788
  %v1003 = vpop.f32.mrb[0].mxu0
  %v1004 = vadd.f32 0.0, %v1003
  %v1005 = vpop.f32.mrb[0].mxu0
  %v1006 = vadd.f32 0.0, %v1005
  %v1007 = vpop.f32.mrb[0].mxu0
  %v1008 = vadd.f32 0.0, %v1007
  %v1009 = vpop.f32.mrb[0].mxu0
  %v1010 = vadd.f32 0.0, %v1009
  %1011 = vmatprep.mubr.bf16.mxu0 0
  %1012 = vmatmul.mubr.bf16.gmra.mrb[0].mxu0 %v789
  %v1013 = vpop.f32.mrb[0].mxu0
  %v1014 = vadd.f32 0.0, %v1013
  %v1015 = vpop.f32.mrb[0].mxu0
  %v1016 = vadd.f32 0.0, %v1015
  %v1017 = vpop.f32.mrb[0].mxu0
  %v1018 = vadd.f32 0.0, %v1017
  %v1019 = vpop.f32.mrb[0].mxu0
  %v1020 = vadd.f32 0.0, %v1019
  %1021 = vmatprep.mubr.bf16.mxu0 0
  %1022 = vmatmul.mubr.bf16.gmra.mrb[0].mxu0 %v790
  %v1023 = vpop.f32.mrb[0].mxu0
  %v1024 = vadd.f32 0.0, %v1023
  %v1025 = vpop.f32.mrb[0].mxu0
  %v1026 = vadd.f32 0.0, %v1025
  %v1027 = vpop.f32.mrb[0].mxu0
  %v1028 = vadd.f32 0.0, %v1027
  %v1029 = vpop.f32.mrb[0].mxu0
  %v1030 = vadd.f32 0.0, %v1029
  %1031 = vmatprep.mubr.bf16.mxu0 0
  %1032 = vmatmul.mubr.bf16.gmra.mrb[0].mxu0 %v791
  %v1033 = vpop.f32.mrb[0].mxu0
  %v1034 = vadd.f32 0.0, %v1033
  %v1035 = vpop.f32.mrb[0].mxu0
  %v1036 = vadd.f32 0.0, %v1035
  %v1037 = vpop.f32.mrb[0].mxu0
  %v1038 = vadd.f32 0.0, %v1037
  %v1039 = vpop.f32.mrb[0].mxu0
  %v1040 = vadd.f32 0.0, %v1039
  %1041 = vmatprep.mubr.bf16.mxu0 0
  %1042 = vmatmul.mubr.bf16.gmra.mrb[0].mxu0 %v792
  %v1043 = vpop.f32.mrb[0].mxu0
  %v1044 = vadd.f32 0.0, %v1043
  %v1045 = vpop.f32.mrb[0].mxu0
  %v1046 = vadd.f32 0.0, %v1045
  %v1047 = vpop.f32.mrb[0].mxu0
  %v1048 = vadd.f32 0.0, %v1047
  %v1049 = vpop.f32.mrb[0].mxu0
  %v1050 = vadd.f32 0.0, %v1049
  %1051 = vmatprep.mubr.bf16.mxu0 0
  %1052 = vmatmul.mubr.bf16.gmra.mrb[0].mxu0 %v793
  %v1053 = vpop.f32.mrb[0].mxu0
  %v1054 = vadd.f32 0.0, %v1053
  %v1055 = vpop.f32.mrb[0].mxu0
  %v1056 = vadd.f32 0.0, %v1055
  %v1057 = vpop.f32.mrb[0].mxu0
  %v1058 = vadd.f32 0.0, %v1057
  %v1059 = vpop.f32.mrb[0].mxu0
  %v1060 = vadd.f32 0.0, %v1059
  %1061 = vmatprep.mubr.bf16.mxu0 0
  %1062 = vmatmul.mubr.bf16.gmra.mrb[0].mxu0 %v794
  %v1063 = vpop.f32.mrb[0].mxu0
  %v1064 = vadd.f32 0.0, %v1063
  %v1065 = vpop.f32.mrb[0].mxu0
  %v1066 = vadd.f32 0.0, %v1065
  %v1067 = vpop.f32.mrb[0].mxu0
  %v1068 = vadd.f32 0.0, %v1067
  %v1069 = vpop.f32.mrb[0].mxu0
  %v1070 = vadd.f32 0.0, %v1069
  %1071 = vmatprep.mubr.bf16.mxu0 0
  %1072 = vmatmul.mubr.bf16.gmra.mrb[0].mxu0 %v795
  %v1073 = vpop.f32.mrb[0].mxu0
  %v1074 = vadd.f32 0.0, %v1073
  %v1075 = vpop.f32.mrb[0].mxu0
  %v1076 = vadd.f32 0.0, %v1075
  %v1077 = vpop.f32.mrb[0].mxu0
  %v1078 = vadd.f32 0.0, %v1077
  %v1079 = vpop.f32.mrb[0].mxu0
  %v1080 = vadd.f32 0.0, %v1079
  %1081 = vmatprep.mubr.bf16.mxu0 0
  %1082 = vmatmul.mubr.bf16.gmra.mrb[0].mxu0 %v796
  %v1083 = vpop.f32.mrb[0].mxu0
  %v1084 = vadd.f32 0.0, %v1083
  %v1085 = vpop.f32.mrb[0].mxu0
  %v1086 = vadd.f32 0.0, %v1085
  %v1087 = vpop.f32.mrb[0].mxu0
  %v1088 = vadd.f32 0.0, %v1087
  %v1089 = vpop.f32.mrb[0].mxu0
  %v1090 = vadd.f32 0.0, %v1089
  %1091 = vmatprep.mubr.bf16.mxu0 0
  %1092 = vmatmul.mubr.bf16.gmra.mrb[0].mxu0 %v797
  %v1093 = vpop.f32.mrb[0].mxu0
  %v1094 = vadd.f32 0.0, %v1093
  %v1095 = vpop.f32.mrb[0].mxu0
  %v1096 = vadd.f32 0.0, %v1095
  %v1097 = vpop.f32.mrb[0].mxu0
  %v1098 = vadd.f32 0.0, %v1097
  %v1099 = vpop.f32.mrb[0].mxu0
  %v1100 = vadd.f32 0.0, %v1099
  %1101 = vmatprep.mubr.bf16.mxu0 0
  %1102 = vmatmul.mubr.bf16.gmra.mrb[0].mxu0 %v798
  %v1103 = vpop.f32.mrb[0].mxu0
  %v1104 = vadd.f32 0.0, %v1103
  %v1105 = vpop.f32.mrb[0].mxu0
  %v1106 = vadd.f32 0.0, %v1105
  %v1107 = vpop.f32.mrb[0].mxu0
  %v1108 = vadd.f32 0.0, %v1107
  %v1109 = vpop.f32.mrb[0].mxu0
  %v1110 = vadd.f32 0.0, %v1109
  %1111 = vmatprep.mubr.bf16.mxu0 0
  %1112 = vmatmul.mubr.bf16.gmra.mrb[0].mxu0 %v799
  %v1113 = vpop.f32.mrb[0].mxu0
  %v1114 = vadd.f32 0.0, %v1113
  %v1115 = vpop.f32.mrb[0].mxu0
  %v1116 = vadd.f32 0.0, %v1115
  %v1117 = vpop.f32.mrb[0].mxu0
  %v1118 = vadd.f32 0.0, %v1117
  %v1119 = vpop.f32.mrb[0].mxu0
  %v1120 = vadd.f32 0.0, %v1119
  %1121 = vmatprep.mubr.bf16.mxu0 0
  %1122 = vmatmul.mubr.bf16.gmra.mrb[0].mxu0 %v800
  %v1123 = vpop.f32.mrb[0].mxu0
  %v1124 = vadd.f32 0.0, %v1123
  %v1125 = vpop.f32.mrb[0].mxu0
  %v1126 = vadd.f32 0.0, %v1125
  %v1127 = vpop.f32.mrb[0].mxu0
  %v1128 = vadd.f32 0.0, %v1127
  %v1129 = vpop.f32.mrb[0].mxu0
  %v1130 = vadd.f32 0.0, %v1129
  %1131 = vmatprep.mubr.bf16.mxu0 0
  %1132 = vmatmul.mubr.bf16.gmra.mrb[0].mxu0 %v801
  %v1133 = vpop.f32.mrb[0].mxu0
  %v1134 = vadd.f32 0.0, %v1133
  %v1135 = vpop.f32.mrb[0].mxu0
  %v1136 = vadd.f32 0.0, %v1135
  %v1137 = vpop.f32.mrb[0].mxu0
  %v1138 = vadd.f32 0.0, %v1137
  %v1139 = vpop.f32.mrb[0].mxu0
  %v1140 = vadd.f32 0.0, %v1139
  %1141 = vmatprep.mubr.bf16.mxu0 0
  %1142 = vmatmul.mubr.bf16.gmra.mrb[0].mxu0 %v802
  %v1143 = vpop.f32.mrb[0].mxu0
  %v1144 = vadd.f32 0.0, %v1143
  %v1145 = vpop.f32.mrb[0].mxu0
  %v1146 = vadd.f32 0.0, %v1145
  %v1147 = vpop.f32.mrb[0].mxu0
  %v1148 = vadd.f32 0.0, %v1147
  %v1149 = vpop.f32.mrb[0].mxu0
  %v1150 = vadd.f32 0.0, %v1149
  %1151 = vmatprep.mubr.bf16.mxu0 0
  %1152 = vmatmul.mubr.bf16.gmra.mrb[0].mxu0 %v803
  %v1153 = vpop.f32.mrb[0].mxu0
  %v1154 = vadd.f32 0.0, %v1153
  %v1155 = vpop.f32.mrb[0].mxu0
  %v1156 = vadd.f32 0.0, %v1155
  %v1157 = vpop.f32.mrb[0].mxu0
  %v1158 = vadd.f32 0.0, %v1157
  %v1159 = vpop.f32.mrb[0].mxu0
  %v1160 = vadd.f32 0.0, %v1159
  %1161 = vmatprep.mubr.bf16.mxu0 0
  %1162 = vmatmul.mubr.bf16.gmra.mrb[0].mxu0 %v804
  %v1163 = vpop.f32.mrb[0].mxu0
  %v1164 = vadd.f32 0.0, %v1163
  %v1165 = vpop.f32.mrb[0].mxu0
  %v1166 = vadd.f32 0.0, %v1165
  %v1167 = vpop.f32.mrb[0].mxu0
  %v1168 = vadd.f32 0.0, %v1167
  %v1169 = vpop.f32.mrb[0].mxu0
  %v1170 = vadd.f32 0.0, %v1169
  %1171 = vmatprep.mubr.bf16.mxu0 0
  %1172 = vmatmul.mubr.bf16.gmra.mrb[0].mxu0 %v805
  %v1173 = vpop.f32.mrb[0].mxu0
  %v1174 = vadd.f32 0.0, %v1173
  %v1175 = vpop.f32.mrb[0].mxu0
  %v1176 = vadd.f32 0.0, %v1175
  %v1177 = vpop.f32.mrb[0].mxu0
  %v1178 = vadd.f32 0.0, %v1177
  %v1179 = vpop.f32.mrb[0].mxu0
  %v1180 = vadd.f32 0.0, %v1179
  %1181 = vmatprep.mubr.bf16.mxu0 0
  %1182 = vmatmul.mubr.bf16.gmra.mrb[0].mxu0 %v806
  %v1183 = vpop.f32.mrb[0].mxu0
  %v1184 = vadd.f32 0.0, %v1183
  %v1185 = vpop.f32.mrb[0].mxu0
  %v1186 = vadd.f32 0.0, %v1185
  %v1187 = vpop.f32.mrb[0].mxu0
  %v1188 = vadd.f32 0.0, %v1187
  %v1189 = vpop.f32.mrb[0].mxu0
  %v1190 = vadd.f32 0.0, %v1189
  %1191 = vmatprep.mubr.bf16.mxu0 0
  %1192 = vmatmul.mubr.bf16.gmra.mrb[0].mxu0 %v807
  %v1193 = vpop.f32.mrb[0].mxu0
  %v1194 = vadd.f32 0.0, %v1193
  %v1195 = vpop.f32.mrb[0].mxu0
  %v1196 = vadd.f32 0.0, %v1195
  %v1197 = vpop.f32.mrb[0].mxu0
  %v1198 = vadd.f32 0.0, %v1197
  %v1199 = vpop.f32.mrb[0].mxu0
  %v1200 = vadd.f32 0.0, %v1199
  %1201 = vmatprep.mubr.bf16.mxu0 0
  %1202 = vmatmul.mubr.bf16.gmra.mrb[0].mxu0 %v808
  %v1203 = vpop.f32.mrb[0].mxu0
  %v1204 = vadd.f32 0.0, %v1203
  %v1205 = vpop.f32.mrb[0].mxu0
  %v1206 = vadd.f32 0.0, %v1205
  %v1207 = vpop.f32.mrb[0].mxu0
  %v1208 = vadd.f32 0.0, %v1207
  %v1209 = vpop.f32.mrb[0].mxu0
  %v1210 = vadd.f32 0.0, %v1209
  %1211 = vmatprep.mubr.bf16.mxu0 0
  %1212 = vmatmul.mubr.bf16.gmra.mrb[0].mxu0 %v809
  %v1213 = vpop.f32.mrb[0].mxu0
  %v1214 = vadd.f32 0.0, %v1213
  %v1215 = vpop.f32.mrb[0].mxu0
  %v1216 = vadd.f32 0.0, %v1215
  %v1217 = vpop.f32.mrb[0].mxu0
  %v1218 = vadd.f32 0.0, %v1217
  %v1219 = vpop.f32.mrb[0].mxu0
  %v1220 = vadd.f32 0.0, %v1219
  %1221 = vmatprep.mubr.bf16.mxu0 0
  %1222 = vmatmul.mubr.bf16.gmra.mrb[0].mxu0 %v810
  %v1223 = vpop.f32.mrb[0].mxu0
  %v1224 = vadd.f32 0.0, %v1223
  %v1225 = vpop.f32.mrb[0].mxu0
  %v1226 = vadd.f32 0.0, %v1225
  %v1227 = vpop.f32.mrb[0].mxu0
  %v1228 = vadd.f32 0.0, %v1227
  %v1229 = vpop.f32.mrb[0].mxu0
  %v1230 = vadd.f32 0.0, %v1229
  %1231 = vmatprep.mubr.bf16.mxu0 0
  %1232 = vmatmul.mubr.bf16.gmra.mrb[0].mxu0 %v811
  %v1233 = vpop.f32.mrb[0].mxu0
  %v1234 = vadd.f32 0.0, %v1233
  %v1235 = vpop.f32.mrb[0].mxu0
  %v1236 = vadd.f32 0.0, %v1235
  %v1237 = vpop.f32.mrb[0].mxu0
  %v1238 = vadd.f32 0.0, %v1237
  %v1239 = vpop.f32.mrb[0].mxu0
  %v1240 = vadd.f32 0.0, %v1239
  %1241 = vmatprep.mubr.bf16.mxu0 0
  %1242 = vmatmul.mubr.bf16.gmra.mrb[0].mxu0 %v812
  %v1243 = vpop.f32.mrb[0].mxu0
  %v1244 = vadd.f32 0.0, %v1243
  %v1245 = vpop.f32.mrb[0].mxu0
  %v1246 = vadd.f32 0.0, %v1245
  %v1247 = vpop.f32.mrb[0].mxu0
  %v1248 = vadd.f32 0.0, %v1247
  %v1249 = vpop.f32.mrb[0].mxu0
  %v1250 = vadd.f32 0.0, %v1249
  %1251 = vmatprep.mubr.bf16.mxu0 0
  %1252 = vmatmul.mubr.bf16.gmra.mrb[0].mxu0 %v813
  %v1253 = vpop.f32.mrb[0].mxu0
  %v1254 = vadd.f32 0.0, %v1253
  %v1255 = vpop.f32.mrb[0].mxu0
  %v1256 = vadd.f32 0.0, %v1255
  %v1257 = vpop.f32.mrb[0].mxu0
  %v1258 = vadd.f32 0.0, %v1257
  %v1259 = vpop.f32.mrb[0].mxu0
  %v1260 = vadd.f32 0.0, %v1259
  %1261 = vmatprep.mubr.bf16.mxu0 0
  %1262 = vmatmul.mubr.bf16.gmra.mrb[0].mxu0 %v814
  %v1263 = vpop.f32.mrb[0].mxu0
  %v1264 = vadd.f32 0.0, %v1263
  %v1265 = vpop.f32.mrb[0].mxu0
  %v1266 = vadd.f32 0.0, %v1265
  %v1267 = vpop.f32.mrb[0].mxu0
  %v1268 = vadd.f32 0.0, %v1267
  %v1269 = vpop.f32.mrb[0].mxu0
  %v1270 = vadd.f32 0.0, %v1269
  %1271 = vmatprep.mubr.bf16.mxu0 0
  %1272 = vmatmul.mubr.bf16.gmra.mrb[0].mxu0 %v815
  %v1273 = vpop.f32.mrb[0].mxu0
  %v1274 = vadd.f32 0.0, %v1273
  %v1275 = vpop.f32.mrb[0].mxu0
  %v1276 = vadd.f32 0.0, %v1275
  %v1277 = vpop.f32.mrb[0].mxu0
  %v1278 = vadd.f32 0.0, %v1277
  %v1279 = vpop.f32.mrb[0].mxu0
  %v1280 = vadd.f32 0.0, %v1279
  %1281 = vmatprep.mubr.bf16.mxu0 0
  %1282 = vmatmul.mubr.bf16.gmra.mrb[0].mxu0 %v816
  %v1283 = vpop.f32.mrb[0].mxu0
  %v1284 = vadd.f32 0.0, %v1283
  %v1285 = vpop.f32.mrb[0].mxu0
  %v1286 = vadd.f32 0.0, %v1285
  %v1287 = vpop.f32.mrb[0].mxu0
  %v1288 = vadd.f32 0.0, %v1287
  %v1289 = vpop.f32.mrb[0].mxu0
  %v1290 = vadd.f32 0.0, %v1289
  %1291 = vmatprep.mubr.bf16.mxu0 0
  %1292 = vmatmul.mubr.bf16.gmra.mrb[0].mxu0 %v817
  %v1293 = vpop.f32.mrb[0].mxu0
  %v1294 = vadd.f32 0.0, %v1293
  %v1295 = vpop.f32.mrb[0].mxu0
  %v1296 = vadd.f32 0.0, %v1295
  %v1297 = vpop.f32.mrb[0].mxu0
  %v1298 = vadd.f32 0.0, %v1297
  %v1299 = vpop.f32.mrb[0].mxu0
  %v1300 = vadd.f32 0.0, %v1299
  %1301 = vmatprep.mubr.bf16.mxu0 0
  %1302 = vmatmul.mubr.bf16.gmra.mrb[0].mxu0 %v818
  %v1303 = vpop.f32.mrb[0].mxu0
  %v1304 = vadd.f32 0.0, %v1303
  %v1305 = vpop.f32.mrb[0].mxu0
  %v1306 = vadd.f32 0.0, %v1305
  %v1307 = vpop.f32.mrb[0].mxu0
  %v1308 = vadd.f32 0.0, %v1307
  %v1309 = vpop.f32.mrb[0].mxu0
  %v1310 = vadd.f32 0.0, %v1309
  %1311 = vmatprep.mubr.bf16.mxu0 0
  %1312 = vmatmul.mubr.bf16.gmra.mrb[0].mxu0 %v819
  %v1313 = vpop.f32.mrb[0].mxu0
  %v1314 = vadd.f32 0.0, %v1313
  %v1315 = vpop.f32.mrb[0].mxu0
  %v1316 = vadd.f32 0.0, %v1315
  %v1317 = vpop.f32.mrb[0].mxu0
  %v1318 = vadd.f32 0.0, %v1317
  %v1319 = vpop.f32.mrb[0].mxu0
  %v1320 = vadd.f32 0.0, %v1319
  %1321 = vmatprep.mubr.bf16.mxu0 0
  %1322 = vmatmul.mubr.bf16.gmra.mrb[0].mxu0 %v820
  %v1323 = vpop.f32.mrb[0].mxu0
  %v1324 = vadd.f32 0.0, %v1323
  %v1325 = vpop.f32.mrb[0].mxu0
  %v1326 = vadd.f32 0.0, %v1325
  %v1327 = vpop.f32.mrb[0].mxu0
  %v1328 = vadd.f32 0.0, %v1327
  %v1329 = vpop.f32.mrb[0].mxu0
  %v1330 = vadd.f32 0.0, %v1329
  %1331 = vmatprep.mubr.bf16.mxu0 0
  %1332 = vmatmul.mubr.bf16.gmra.mrb[0].mxu0 %v821
  %v1333 = vpop.f32.mrb[0].mxu0
  %v1334 = vadd.f32 0.0, %v1333
  %v1335 = vpop.f32.mrb[0].mxu0
  %v1336 = vadd.f32 0.0, %v1335
  %v1337 = vpop.f32.mrb[0].mxu0
  %v1338 = vadd.f32 0.0, %v1337
  %v1339 = vpop.f32.mrb[0].mxu0
  %v1340 = vadd.f32 0.0, %v1339
  %1341 = vmatprep.mubr.bf16.mxu0 0
  %1342 = vmatmul.mubr.bf16.gmra.mrb[0].mxu0 %v822
  %v1343 = vpop.f32.mrb[0].mxu0
  %v1344 = vadd.f32 0.0, %v1343
  %v1345 = vpop.f32.mrb[0].mxu0
  %v1346 = vadd.f32 0.0, %v1345
  %v1347 = vpop.f32.mrb[0].mxu0
  %v1348 = vadd.f32 0.0, %v1347
  %v1349 = vpop.f32.mrb[0].mxu0
  %v1350 = vadd.f32 0.0, %v1349
  %1351 = vdwg.mxu0
  %1352 = vst [vmem:[%s5] sm:$0xff] %v874
  %1353 = vst.msk [vmem:[%s5 + $0x8] sm:$0xff] %vm117, %v876
  %1354 = vst [vmem:[%s5 + $0x10] sm:$0xff] %v878
  %1355 = vst.msk [vmem:[%s5 + $0x18] sm:$0xff] %vm117, %v880
  %1356 = vst [vmem:[%s5 + $0x20] sm:$0xff] %v884
  %1357 = vst.msk [vmem:[%s5 + $0x28] sm:$0xff] %vm117, %v886
  %1358 = vst [vmem:[%s5 + $0x30] sm:$0xff] %v888
  %1359 = vst.msk [vmem:[%s5 + $0x38] sm:$0xff] %vm117, %v890
  %1360 = vst [vmem:[%s5 + $0x40] sm:$0xff] %v894
  %1361 = vst.msk [vmem:[%s5 + $0x48] sm:$0xff] %vm117, %v896
  %1362 = vst [vmem:[%s5 + $0x50] sm:$0xff] %v898
  %1363 = vst.msk [vmem:[%s5 + $0x58] sm:$0xff] %vm117, %v900
  %1364 = vst [vmem:[%s5 + $0x60] sm:$0xff] %v904
  %1365 = vst.msk [vmem:[%s5 + $0x68] sm:$0xff] %vm117, %v906
  %1366 = vst [vmem:[%s5 + $0x70] sm:$0xff] %v908
  %1367 = vst.msk [vmem:[%s5 + $0x78] sm:$0xff] %vm117, %v910
  %1368 = vst [vmem:[%s5 + $0x80] sm:$0xff] %v914
  %1369 = vst.msk [vmem:[%s5 + $0x88] sm:$0xff] %vm117, %v916
  %1370 = vst [vmem:[%s5 + $0x90] sm:$0xff] %v918
  %1371 = vst.msk [vmem:[%s5 + $0x98] sm:$0xff] %vm117, %v920
  %1372 = vst [vmem:[%s5 + $0xa0] sm:$0xff] %v924
  %1373 = vst.msk [vmem:[%s5 + $0xa8] sm:$0xff] %vm117, %v926
  %1374 = vst [vmem:[%s5 + $0xb0] sm:$0xff] %v928
  %1375 = vst.msk [vmem:[%s5 + $0xb8] sm:$0xff] %vm117, %v930
  %1376 = vst [vmem:[%s5 + $0xc0] sm:$0xff] %v934
  %1377 = vst.msk [vmem:[%s5 + $0xc8] sm:$0xff] %vm117, %v936
  %1378 = vst [vmem:[%s5 + $0xd0] sm:$0xff] %v938
  %1379 = vst.msk [vmem:[%s5 + $0xd8] sm:$0xff] %vm117, %v940
  %1380 = vst [vmem:[%s5 + $0xe0] sm:$0xff] %v944
  %1381 = vst.msk [vmem:[%s5 + $0xe8] sm:$0xff] %vm117, %v946
  %1382 = vst [vmem:[%s5 + $0xf0] sm:$0xff] %v948
  %1383 = vst.msk [vmem:[%s5 + $0xf8] sm:$0xff] %vm117, %v950
  %1384 = vst [vmem:[%s5 + $0x100] sm:$0xff] %v954
  %1385 = vst.msk [vmem:[%s5 + $0x108] sm:$0xff] %vm117, %v956
  %1386 = vst [vmem:[%s5 + $0x110] sm:$0xff] %v958
  %1387 = vst.msk [vmem:[%s5 + $0x118] sm:$0xff] %vm117, %v960
  %1388 = vst [vmem:[%s5 + $0x120] sm:$0xff] %v964
  %1389 = vst.msk [vmem:[%s5 + $0x128] sm:$0xff] %vm117, %v966
  %1390 = vst [vmem:[%s5 + $0x130] sm:$0xff] %v968
  %1391 = vst.msk [vmem:[%s5 + $0x138] sm:$0xff] %vm117, %v970
  %1392 = vst [vmem:[%s5 + $0x140] sm:$0xff] %v974
  %1393 = vst.msk [vmem:[%s5 + $0x148] sm:$0xff] %vm117, %v976
  %1394 = vst [vmem:[%s5 + $0x150] sm:$0xff] %v978
  %1395 = vst.msk [vmem:[%s5 + $0x158] sm:$0xff] %vm117, %v980
  %1396 = vst [vmem:[%s5 + $0x160] sm:$0xff] %v984
  %1397 = vst.msk [vmem:[%s5 + $0x168] sm:$0xff] %vm117, %v986
  %1398 = vst [vmem:[%s5 + $0x170] sm:$0xff] %v988
  %1399 = vst.msk [vmem:[%s5 + $0x178] sm:$0xff] %vm117, %v990
  %1400 = vst [vmem:[%s5 + $0x180] sm:$0xff] %v994
  %1401 = vst.msk [vmem:[%s5 + $0x188] sm:$0xff] %vm117, %v996
  %1402 = vst [vmem:[%s5 + $0x190] sm:$0xff] %v998
  %1403 = vst.msk [vmem:[%s5 + $0x198] sm:$0xff] %vm117, %v1000
  %1404 = vst [vmem:[%s5 + $0x1a0] sm:$0xff] %v1004
  %1405 = vst.msk [vmem:[%s5 + $0x1a8] sm:$0xff] %vm117, %v1006
  %1406 = vst [vmem:[%s5 + $0x1b0] sm:$0xff] %v1008
  %1407 = vst.msk [vmem:[%s5 + $0x1b8] sm:$0xff] %vm117, %v1010
  %1408 = vst [vmem:[%s5 + $0x1c0] sm:$0xff] %v1014
  %1409 = vst.msk [vmem:[%s5 + $0x1c8] sm:$0xff] %vm117, %v1016
  %1410 = vst [vmem:[%s5 + $0x1d0] sm:$0xff] %v1018
  %1411 = vst.msk [vmem:[%s5 + $0x1d8] sm:$0xff] %vm117, %v1020
  %1412 = vst [vmem:[%s5 + $0x1e0] sm:$0xff] %v1024
  %1413 = vst.msk [vmem:[%s5 + $0x1e8] sm:$0xff] %vm117, %v1026
  %1414 = vst [vmem:[%s5 + $0x1f0] sm:$0xff] %v1028
  %1415 = vst.msk [vmem:[%s5 + $0x1f8] sm:$0xff] %vm117, %v1030
  %1416 = vst [vmem:[%s5 + $0x200] sm:$0xff] %v1034
  %1417 = vst.msk [vmem:[%s5 + $0x208] sm:$0xff] %vm117, %v1036
  %1418 = vst [vmem:[%s5 + $0x210] sm:$0xff] %v1038
  %1419 = vst.msk [vmem:[%s5 + $0x218] sm:$0xff] %vm117, %v1040
  %1420 = vst [vmem:[%s5 + $0x220] sm:$0xff] %v1044
  %1421 = vst.msk [vmem:[%s5 + $0x228] sm:$0xff] %vm117, %v1046
  %1422 = vst [vmem:[%s5 + $0x230] sm:$0xff] %v1048
  %1423 = vst.msk [vmem:[%s5 + $0x238] sm:$0xff] %vm117, %v1050
  %1424 = vst [vmem:[%s5 + $0x240] sm:$0xff] %v1054
  %1425 = vst.msk [vmem:[%s5 + $0x248] sm:$0xff] %vm117, %v1056
  %1426 = vst [vmem:[%s5 + $0x250] sm:$0xff] %v1058
  %1427 = vst.msk [vmem:[%s5 + $0x258] sm:$0xff] %vm117, %v1060
  %1428 = vst [vmem:[%s5 + $0x260] sm:$0xff] %v1064
  %1429 = vst.msk [vmem:[%s5 + $0x268] sm:$0xff] %vm117, %v1066
  %1430 = vst [vmem:[%s5 + $0x270] sm:$0xff] %v1068
  %1431 = vst.msk [vmem:[%s5 + $0x278] sm:$0xff] %vm117, %v1070
  %1432 = vst [vmem:[%s5 + $0x280] sm:$0xff] %v1074
  %1433 = vst.msk [vmem:[%s5 + $0x288] sm:$0xff] %vm117, %v1076
  %1434 = vst [vmem:[%s5 + $0x290] sm:$0xff] %v1078
  %1435 = vst.msk [vmem:[%s5 + $0x298] sm:$0xff] %vm117, %v1080
  %1436 = vst [vmem:[%s5 + $0x2a0] sm:$0xff] %v1084
  %1437 = vst.msk [vmem:[%s5 + $0x2a8] sm:$0xff] %vm117, %v1086
  %1438 = vst [vmem:[%s5 + $0x2b0] sm:$0xff] %v1088
  %1439 = vst.msk [vmem:[%s5 + $0x2b8] sm:$0xff] %vm117, %v1090
  %1440 = vst [vmem:[%s5 + $0x2c0] sm:$0xff] %v1094
  %1441 = vst.msk [vmem:[%s5 + $0x2c8] sm:$0xff] %vm117, %v1096
  %1442 = vst [vmem:[%s5 + $0x2d0] sm:$0xff] %v1098
  %1443 = vst.msk [vmem:[%s5 + $0x2d8] sm:$0xff] %vm117, %v1100
  %1444 = vst [vmem:[%s5 + $0x2e0] sm:$0xff] %v1104
  %1445 = vst.msk [vmem:[%s5 + $0x2e8] sm:$0xff] %vm117, %v1106
  %1446 = vst [vmem:[%s5 + $0x2f0] sm:$0xff] %v1108
  %1447 = vst.msk [vmem:[%s5 + $0x2f8] sm:$0xff] %vm117, %v1110
  %1448 = vst [vmem:[%s5 + $0x300] sm:$0xff] %v1114
  %1449 = vst.msk [vmem:[%s5 + $0x308] sm:$0xff] %vm117, %v1116
  %1450 = vst [vmem:[%s5 + $0x310] sm:$0xff] %v1118
  %1451 = vst.msk [vmem:[%s5 + $0x318] sm:$0xff] %vm117, %v1120
  %1452 = vst [vmem:[%s5 + $0x320] sm:$0xff] %v1124
  %1453 = vst.msk [vmem:[%s5 + $0x328] sm:$0xff] %vm117, %v1126
  %1454 = vst [vmem:[%s5 + $0x330] sm:$0xff] %v1128
  %1455 = vst.msk [vmem:[%s5 + $0x338] sm:$0xff] %vm117, %v1130
  %1456 = vst [vmem:[%s5 + $0x340] sm:$0xff] %v1134
  %1457 = vst.msk [vmem:[%s5 + $0x348] sm:$0xff] %vm117, %v1136
  %1458 = vst [vmem:[%s5 + $0x350] sm:$0xff] %v1138
  %1459 = vst.msk [vmem:[%s5 + $0x358] sm:$0xff] %vm117, %v1140
  %1460 = vst [vmem:[%s5 + $0x360] sm:$0xff] %v1144
  %1461 = vst.msk [vmem:[%s5 + $0x368] sm:$0xff] %vm117, %v1146
  %1462 = vst [vmem:[%s5 + $0x370] sm:$0xff] %v1148
  %1463 = vst.msk [vmem:[%s5 + $0x378] sm:$0xff] %vm117, %v1150
  %1464 = vst [vmem:[%s5 + $0x380] sm:$0xff] %v1154
  %1465 = vst.msk [vmem:[%s5 + $0x388] sm:$0xff] %vm117, %v1156
  %1466 = vst [vmem:[%s5 + $0x390] sm:$0xff] %v1158
  %1467 = vst.msk [vmem:[%s5 + $0x398] sm:$0xff] %vm117, %v1160
  %1468 = vst [vmem:[%s5 + $0x3a0] sm:$0xff] %v1164
  %1469 = vst.msk [vmem:[%s5 + $0x3a8] sm:$0xff] %vm117, %v1166
  %1470 = vst [vmem:[%s5 + $0x3b0] sm:$0xff] %v1168
  %1471 = vst.msk [vmem:[%s5 + $0x3b8] sm:$0xff] %vm117, %v1170
  %1472 = vst [vmem:[%s5 + $0x3c0] sm:$0xff] %v1174
  %1473 = vst.msk [vmem:[%s5 + $0x3c8] sm:$0xff] %vm117, %v1176
  %1474 = vst [vmem:[%s5 + $0x3d0] sm:$0xff] %v1178
  %1475 = vst.msk [vmem:[%s5 + $0x3d8] sm:$0xff] %vm117, %v1180
  %1476 = vst [vmem:[%s5 + $0x3e0] sm:$0xff] %v1184
  %1477 = vst.msk [vmem:[%s5 + $0x3e8] sm:$0xff] %vm117, %v1186
  %1478 = vst [vmem:[%s5 + $0x3f0] sm:$0xff] %v1188
  %1479 = vst.msk [vmem:[%s5 + $0x3f8] sm:$0xff] %vm117, %v1190
  %1480 = vst [vmem:[%s5 + $0x400] sm:$0xff] %v1194
  %1481 = vst.msk [vmem:[%s5 + $0x408] sm:$0xff] %vm117, %v1196
  %1482 = vst [vmem:[%s5 + $0x410] sm:$0xff] %v1198
  %1483 = vst.msk [vmem:[%s5 + $0x418] sm:$0xff] %vm117, %v1200
  %1484 = vst [vmem:[%s5 + $0x420] sm:$0xff] %v1204
  %1485 = vst.msk [vmem:[%s5 + $0x428] sm:$0xff] %vm117, %v1206
  %1486 = vst [vmem:[%s5 + $0x430] sm:$0xff] %v1208
  %1487 = vst.msk [vmem:[%s5 + $0x438] sm:$0xff] %vm117, %v1210
  %1488 = vst [vmem:[%s5 + $0x440] sm:$0xff] %v1214
  %1489 = vst.msk [vmem:[%s5 + $0x448] sm:$0xff] %vm117, %v1216
  %1490 = vst [vmem:[%s5 + $0x450] sm:$0xff] %v1218
  %1491 = vst.msk [vmem:[%s5 + $0x458] sm:$0xff] %vm117, %v1220
  %1492 = vst [vmem:[%s5 + $0x460] sm:$0xff] %v1224
  %1493 = vst.msk [vmem:[%s5 + $0x468] sm:$0xff] %vm117, %v1226
  %1494 = vst [vmem:[%s5 + $0x470] sm:$0xff] %v1228
  %1495 = vst.msk [vmem:[%s5 + $0x478] sm:$0xff] %vm117, %v1230
  %1496 = vst [vmem:[%s5 + $0x480] sm:$0xff] %v1234
  %1497 = vst.msk [vmem:[%s5 + $0x488] sm:$0xff] %vm117, %v1236
  %1498 = vst [vmem:[%s5 + $0x490] sm:$0xff] %v1238
  %1499 = vst.msk [vmem:[%s5 + $0x498] sm:$0xff] %vm117, %v1240
  %1500 = vst [vmem:[%s5 + $0x4a0] sm:$0xff] %v1244
  %1501 = vst.msk [vmem:[%s5 + $0x4a8] sm:$0xff] %vm117, %v1246
  %1502 = vst [vmem:[%s5 + $0x4b0] sm:$0xff] %v1248
  %1503 = vst.msk [vmem:[%s5 + $0x4b8] sm:$0xff] %vm117, %v1250
  %1504 = vst [vmem:[%s5 + $0x4c0] sm:$0xff] %v1254
  %1505 = vst.msk [vmem:[%s5 + $0x4c8] sm:$0xff] %vm117, %v1256
  %1506 = vst [vmem:[%s5 + $0x4d0] sm:$0xff] %v1258
  %1507 = vst.msk [vmem:[%s5 + $0x4d8] sm:$0xff] %vm117, %v1260
  %1508 = vst [vmem:[%s5 + $0x4e0] sm:$0xff] %v1264
  %1509 = vst.msk [vmem:[%s5 + $0x4e8] sm:$0xff] %vm117, %v1266
  %1510 = vst [vmem:[%s5 + $0x4f0] sm:$0xff] %v1268
  %1511 = vst.msk [vmem:[%s5 + $0x4f8] sm:$0xff] %vm117, %v1270
  %1512 = vst [vmem:[%s5 + $0x500] sm:$0xff] %v1274
  %1513 = vst.msk [vmem:[%s5 + $0x508] sm:$0xff] %vm117, %v1276
  %1514 = vst [vmem:[%s5 + $0x510] sm:$0xff] %v1278
  %1515 = vst.msk [vmem:[%s5 + $0x518] sm:$0xff] %vm117, %v1280
  %1516 = vst [vmem:[%s5 + $0x520] sm:$0xff] %v1284
  %1517 = vst.msk [vmem:[%s5 + $0x528] sm:$0xff] %vm117, %v1286
  %1518 = vst [vmem:[%s5 + $0x530] sm:$0xff] %v1288
  %1519 = vst.msk [vmem:[%s5 + $0x538] sm:$0xff] %vm117, %v1290
  %1520 = vst [vmem:[%s5 + $0x540] sm:$0xff] %v1294
  %1521 = vst.msk [vmem:[%s5 + $0x548] sm:$0xff] %vm117, %v1296
  %1522 = vst [vmem:[%s5 + $0x550] sm:$0xff] %v1298
  %1523 = vst.msk [vmem:[%s5 + $0x558] sm:$0xff] %vm117, %v1300
  %1524 = vst [vmem:[%s5 + $0x560] sm:$0xff] %v1304
  %1525 = vst.msk [vmem:[%s5 + $0x568] sm:$0xff] %vm117, %v1306
  %1526 = vst [vmem:[%s5 + $0x570] sm:$0xff] %v1308
  %1527 = vst.msk [vmem:[%s5 + $0x578] sm:$0xff] %vm117, %v1310
  %1528 = vst [vmem:[%s5 + $0x580] sm:$0xff] %v1314
  %1529 = vst.msk [vmem:[%s5 + $0x588] sm:$0xff] %vm117, %v1316
  %1530 = vst [vmem:[%s5 + $0x590] sm:$0xff] %v1318
  %1531 = vst.msk [vmem:[%s5 + $0x598] sm:$0xff] %vm117, %v1320
  %1532 = vst [vmem:[%s5 + $0x5a0] sm:$0xff] %v1324
  %1533 = vst.msk [vmem:[%s5 + $0x5a8] sm:$0xff] %vm117, %v1326
  %1534 = vst [vmem:[%s5 + $0x5b0] sm:$0xff] %v1328
  %1535 = vst.msk [vmem:[%s5 + $0x5b8] sm:$0xff] %vm117, %v1330
  %1536 = vst [vmem:[%s5 + $0x5c0] sm:$0xff] %v1334
  %1537 = vst.msk [vmem:[%s5 + $0x5c8] sm:$0xff] %vm117, %v1336
  %1538 = vst [vmem:[%s5 + $0x5d0] sm:$0xff] %v1338
  %1539 = vst.msk [vmem:[%s5 + $0x5d8] sm:$0xff] %vm117, %v1340
  %1540 = vst [vmem:[%s5 + $0x5e0] sm:$0xff] %v1344
  %1541 = vst.msk [vmem:[%s5 + $0x5e8] sm:$0xff] %vm117, %v1346
  %1542 = vst [vmem:[%s5 + $0x5f0] sm:$0xff] %v1348
  %1543 = vst.msk [vmem:[%s5 + $0x5f8] sm:$0xff] %vm117, %v1350
  // Predicated region
  $region22: #{tpu_custom_call.1} parent=0 // pred_check
    _
  $region23: #{tpu_custom_call.1} parent=0 // pred_check_branch
    %1545 = sbr.rel (0) target = $region25
  $region24: #{tpu_custom_call.1} parent=0 // pred_region
    _
  $region25: #{tpu_custom_call.1} parent=0 // pred_fallthru
    _
  // Predicated region
  $region26: #{tpu_custom_call.1} parent=0 // pred_check
    _
  $region27: #{tpu_custom_call.1} parent=0 // pred_check_branch
    %1547 = sbr.rel (0) target = $region29
  $region28: #{tpu_custom_call.1} parent=0 // pred_region
    _
  $region29: #{tpu_custom_call.1} parent=0 // pred_fallthru
    _

</llo_original>
